<compile_context>
chip_gen: v7x
topology: tpu7x:2x2x1
jax: 0.10.0
libtpu: 0.0.40
codegen_flags: <defaults>
</compile_context>

<pallas_src>
import functools

import jax
import jax.numpy as jnp
from jax import lax
from jax.experimental import pallas as pl
from jax.experimental.pallas import tpu as pltpu


def _mincut_kernel(inv_temp, matmul_dtype,
                   x_ref, adj_ref, wslab_ref, w2t_ref, vecs_ref, b2_ref,
                   pool_ref, gs_ref):
    f32 = jnp.float32
    md = matmul_dtype

    x = x_ref[...].astype(f32)               # (TB, N, H)
    tb, n, h = x.shape
    k = w2t_ref.shape[0]

    x_md = x.astype(md)
    xf = x_md.reshape(tb * n, h)              # flatten batch tile into M dim
    adj_md = adj_ref[...].astype(md)          # (TB, N, N)

    vecs = vecs_ref[...]                      # (8, H) packed vectors
    b1a = vecs[0:1, :]                        # W1 first linear bias
    ln_g = vecs[1:2, :]                       # LayerNorm gamma
    ln_b = vecs[2:3, :]                       # LayerNorm beta
    b1b = vecs[3:4, :]                        # W1 second linear bias

    # ---- out = relu((adj+I) @ Wm(x)) + Ws(x); Wm|Ws fused, identity folded --
    hm_hs = jnp.dot(xf, wslab_ref[:, 0:2 * h].astype(md),
                    preferred_element_type=f32)            # (TB*N, 2H)
    hm3 = hm_hs[:, 0:h].reshape(tb, n, h)
    hs3 = hm_hs[:, h:2 * h].reshape(tb, n, h)
    a_hm = jnp.einsum('bij,bjh->bih', adj_md, hm3.astype(md),
                      preferred_element_type=f32) + hm3     # adj@hm + hm
    out = jnp.maximum(a_hm, 0.0) + hs3                      # (TB, N, H) f32

    # ---- W1 = Linear -> LayerNorm -> ReLU -> Linear, then outer ReLU -------
    outf = out.reshape(tb * n, h)
    t = jnp.dot(outf.astype(md), wslab_ref[:, 2 * h:3 * h].astype(md),
                preferred_element_type=f32) + b1a
    mu = jnp.mean(t, axis=-1, keepdims=True)
    var = jnp.mean((t - mu) ** 2, axis=-1, keepdims=True)
    t = (t - mu) * lax.rsqrt(var + 1e-5) * ln_g + ln_b
    t = jnp.maximum(t, 0.0)
    w1o = jnp.dot(t.astype(md), wslab_ref[:, 3 * h:4 * h].astype(md),
                  preferred_element_type=f32) + b1b
    w1o = jnp.maximum(w1o, 0.0)                              # torch.relu(W1(out))
    w1o3 = w1o.reshape(tb, n, h)

    # ---- s^T = (W2((adj+I)@w1o) + b2) / temp, built directly as (K, N) -----
    aw = jnp.einsum('bij,bjh->bih', adj_md, w1o3.astype(md),
                    preferred_element_type=f32) + w1o3       # (TB, N, H)
    w2t_b = jnp.broadcast_to(w2t_ref[...].astype(md)[None], (tb, k, h))
    s_t = jnp.einsum('bkh,bnh->bkn', w2t_b, aw.astype(md),
                     preferred_element_type=f32)             # (TB, K, N)
    s_t = (s_t + b2_ref[...][None]) * inv_temp               # b2 is (K, 1)

    # ---- gamma = softmax over K (sublane axis here); exact divide ----------
    smax = jnp.max(s_t, axis=1, keepdims=True)
    e = jnp.exp(s_t - smax)
    gamma_t = e / jnp.sum(e, axis=1, keepdims=True)          # (TB, K, N)

    # ---- node_pool = gamma^T @ node_fea, contracted straight from (K, N) ---
    pool = jnp.einsum('bkn,bnh->bkh', gamma_t.astype(md), x_md,
                      preferred_element_type=f32)            # (TB, K, H)

    # Lane-dense stores.
    pool_ref[...] = pool.reshape(tb, 1, k * h).astype(pool_ref.dtype)
    gs_ref[:, 0:k, :] = gamma_t.astype(gs_ref.dtype)
    gs_ref[:, k:2 * k, :] = s_t.astype(gs_ref.dtype)


def _vmem_config():
    """Generation-aware (tile budget, scoped vmem limit) in bytes."""
    cap = 64 << 20
    try:
        cap = int(getattr(pltpu.get_tpu_info(), "vmem_capacity_bytes", cap))
    except Exception:
        pass
    if cap >= (96 << 20):            # v5e / v6e: 128 MiB physical VMEM
        return 32 << 20, 64 << 20
    return 16 << 20, 48 << 20        # v7x: 64 MiB physical, keep headroom


def _pick_tb(B, N, H, K, adj_itemsize, vmem_budget_bytes, target_rows=1024):
    """Largest divisor of B within the VMEM budget; keeps grid >= 2."""
    per_b_io = 2 * (adj_itemsize * N * N + 4 * (N * H + K * H + 2 * K * N))
    per_b_tmp = 8 * 4 * N * H        # rough f32 intermediate footprint
    per_b = max(1, per_b_io + per_b_tmp)
    cap = min(vmem_budget_bytes // per_b, max(1, target_rows // N))
    if B >= 2:
        cap = min(cap, B // 2)       # grid >= 2 -> both TCs busy on v7x
    cap = max(1, cap)
    tb = 1
    for cand in range(1, B + 1):
        if B % cand == 0 and cand <= cap:
            tb = cand
    return tb


def mincut_pooling_forward(node_fea, adj, params, temp=1.0,
                           matmul_dtype=jnp.float32, adj_dtype=None):
    """node_fea: (B, N, H), adj: (B, N, N) symmetrically normalized."""
    B, N, H = node_fea.shape
    assert adj.shape == (B, N, N)
    K = params["w2"].shape[1]
    # Reference module requires input_dim == hidden_dim.
    assert params["wm"].shape == (H, H) and params["ws"].shape == (H, H)

    # Pad the node dim to a multiple of 8 (tile-aligned in-kernel reshapes).
    pad = (-N) % 8
    if pad:
        node_fea = jnp.pad(node_fea, ((0, 0), (0, pad), (0, 0)))
        adj = jnp.pad(adj, ((0, 0), (0, pad), (0, pad)))
    Np = N + pad

    node_fea = node_fea.astype(jnp.float32)
    if adj_dtype is not None:        # e.g. bf16 adj in HBM on v5e/v6e
        adj = adj.astype(adj_dtype)
    else:
        adj = adj.astype(jnp.float32)

    # ---- pack parameters (fewer streams; enables the Wm|Ws fusion) ---------
    wslab = jnp.concatenate(
        [params["wm"], params["ws"], params["w1a_w"], params["w1b_w"]],
        axis=1).astype(jnp.float32)                         # (H, 4H)
    w2t = jnp.asarray(params["w2"]).T.astype(jnp.float32)   # (K, H)
    vecs = jnp.zeros((8, H), jnp.float32)
    vecs = vecs.at[0].set(params["w1a_b"].reshape(H))
    vecs = vecs.at[1].set(params["ln_g"].reshape(H))
    vecs = vecs.at[2].set(params["ln_b"].reshape(H))
    vecs = vecs.at[3].set(params["w1b_b"].reshape(H))
    b2col = jnp.asarray(params["w2_b"]).reshape(K, 1).astype(jnp.float32)

    tile_budget, vmem_limit = _vmem_config()
    TB = _pick_tb(B, Np, H, K, adj.dtype.itemsize, tile_budget)
    grid = (B // TB,)

    in_specs = [
        pl.BlockSpec((TB, Np, H), lambda b: (b, 0, 0)),      # node_fea tile
        pl.BlockSpec((TB, Np, Np), lambda b: (b, 0, 0)),     # adj tile
        pl.BlockSpec((H, 4 * H), lambda b: (0, 0)),          # [Wm|Ws|W1a|W1b]
        pl.BlockSpec((K, H), lambda b: (0, 0)),              # W2^T
        pl.BlockSpec((8, H), lambda b: (0, 0)),              # packed vectors
        pl.BlockSpec((K, 1), lambda b: (0, 0)),              # W2 bias (column)
    ]
    out_specs = [
        pl.BlockSpec((TB, 1, K * H), lambda b: (b, 0, 0)),   # pool (lane-dense)
        pl.BlockSpec((TB, 2 * K, Np), lambda b: (b, 0, 0)),  # [gamma^T ; s^T]
    ]
    out_shapes = (
        jax.ShapeDtypeStruct((B, 1, K * H), jnp.float32),
        jax.ShapeDtypeStruct((B, 2 * K, Np), jnp.float32),
    )

    flops = B * (8 * Np * H * H + 4 * Np * Np * H + 4 * Np * H * K)
    cost = pl.CostEstimate(
        flops=flops,
        transcendentals=B * Np * (K + 1),
        bytes_accessed=(B * (adj.dtype.itemsize * Np * Np
                             + 4 * (Np * H + K * H + 2 * K * Np))
                        + 4 * (4 * H * H + K * H + 8 * H + K)),
    )

    kernel = functools.partial(_mincut_kernel, float(1.0 / temp), matmul_dtype)

    pool_flat, gs = pl.pallas_call(
        kernel,
        out_shape=out_shapes,
        grid_spec=pltpu.PrefetchScalarGridSpec(
            num_scalar_prefetch=0,
            grid=grid,
            in_specs=in_specs,
            out_specs=out_specs),
        compiler_params=pltpu.CompilerParams(
            dimension_semantics=("parallel",),
            vmem_limit_bytes=vmem_limit),
        cost_estimate=cost,
    )(node_fea, adj, wslab, w2t, vecs, b2col)

    # Layout plumbing back to the reference convention (cheap, outside kernel).
    pool = pool_flat.reshape(B, K, H)
    gamma = jnp.swapaxes(gs[:, 0:K, 0:N], 1, 2)
    s = jnp.swapaxes(gs[:, K:2 * K, 0:N], 1, 2)
    return pool, gamma, s


def _reference_forward(node_fea, adj, params, temp=1.0):
    """Pure-JAX reference mirroring the PyTorch module."""
    B, N, H = node_fea.shape
    eye = jnp.eye(N, dtype=adj.dtype)[None]
    A = adj + eye
    out = jax.nn.relu(A @ (node_fea @ params["wm"])) + node_fea @ params["ws"]
    t = out @ params["w1a_w"] + params["w1a_b"]
    mu = jnp.mean(t, axis=-1, keepdims=True)
    var = jnp.mean((t - mu) ** 2, axis=-1, keepdims=True)
    t = (t - mu) / jnp.sqrt(var + 1e-5) * params["ln_g"] + params["ln_b"]
    w1out = jax.nn.relu(t) @ params["w1b_w"] + params["w1b_b"]
    s = ((A @ jax.nn.relu(w1out)) @ params["w2"] + params["w2_b"]) / temp
    gamma = jax.nn.softmax(s, axis=-1)
    node_pool = jnp.einsum("bnk,bnh->bkh", gamma, node_fea)
    return node_pool, gamma, s


def _init_params(key, hidden_dim, K):
    ks = jax.random.split(key, 7)
    scale = 1.0 / jnp.sqrt(hidden_dim)
    # Weights stored as (in_dim, out_dim), i.e. already transposed vs torch.
    return {
        "wm":    jax.random.normal(ks[0], (hidden_dim, hidden_dim), jnp.float32) * scale,
        "ws":    jax.random.normal(ks[1], (hidden_dim, hidden_dim), jnp.float32) * scale,
        "w1a_w": jax.random.normal(ks[2], (hidden_dim, hidden_dim), jnp.float32) * scale,
        "w1a_b": jax.random.normal(ks[3], (1, hidden_dim), jnp.float32) * 0.1,
        "ln_g":  jnp.ones((1, hidden_dim), jnp.float32),
        "ln_b":  jnp.zeros((1, hidden_dim), jnp.float32),
        "w1b_w": jax.random.normal(ks[4], (hidden_dim, hidden_dim), jnp.float32) * scale,
        "w1b_b": jax.random.normal(ks[5], (1, hidden_dim), jnp.float32) * 0.1,
        "w2":    jax.random.normal(ks[6], (hidden_dim, K), jnp.float32) * scale,
        "w2_b":  jnp.zeros((1, K), jnp.float32),
    }


if __name__ == "__main__":
    B, N, H, K = 2, 16, 32, 8
    temp = 1.0

    key = jax.random.PRNGKey(0)
    k_x, k_a, k_p = jax.random.split(key, 3)

    node_fea = jax.random.normal(k_x, (B, N, H), jnp.float32)
    # Symmetric, degree-normalized adjacency.
    raw = jax.random.uniform(k_a, (B, N, N), jnp.float32)
    adj = 0.5 * (raw + jnp.swapaxes(raw, 1, 2))
    deg = jnp.sum(adj, axis=-1, keepdims=True)
    adj = adj / jnp.sqrt(deg) / jnp.sqrt(jnp.swapaxes(deg, 1, 2))

    params = _init_params(k_p, H, K)

    # Demo runs the f32 path; on v6e/v7x production use
    # matmul_dtype=jnp.bfloat16, adj_dtype=jnp.bfloat16 (relax tolerances).
    pool, gamma, s = mincut_pooling_forward(node_fea, adj, params, temp=temp)
    jax.block_until_ready((pool, gamma, s))

    ref_pool, ref_gamma, ref_s = _reference_forward(node_fea, adj, params, temp=temp)
    assert jnp.allclose(s, ref_s, atol=5e-4, rtol=5e-4)
    assert jnp.allclose(gamma, ref_gamma, atol=5e-4, rtol=5e-4)
    assert jnp.allclose(pool, ref_pool, atol=2e-3, rtol=2e-3)

    print("KERNEL_OK")
</pallas_src>

<mosaic_0001>
module attributes {stable_mosaic.version = 11 : i64} {
  func.func @_mincut_kernel(%arg0: i32, %arg1: memref<1x16x32xf32, #tpu.memory_space<vmem>>, %arg2: memref<1x16x16xf32, #tpu.memory_space<vmem>>, %arg3: memref<32x128xf32, #tpu.memory_space<vmem>>, %arg4: memref<8x32xf32, #tpu.memory_space<vmem>>, %arg5: memref<8x32xf32, #tpu.memory_space<vmem>>, %arg6: memref<8x1xf32, #tpu.memory_space<vmem>>, %arg7: memref<1x1x256xf32, #tpu.memory_space<vmem>>, %arg8: memref<1x16x16xf32, #tpu.memory_space<vmem>>) attributes {dimension_semantics = [#tpu.dimension_semantics<parallel>], iteration_bounds = array<i64: 2>, scalar_prefetch = 0 : i64, scratch_operands = 0 : i64, tpu.core_type = #tpu.core_type<tc>, window_params = [{transform_indices = @transform_0, window_bounds = array<i64: 1, 16, 32>}, {transform_indices = @transform_1, window_bounds = array<i64: 1, 16, 16>}, {pipeline_mode = #tpu.pipeline_mode<synchronous>, transform_indices = @transform_2, window_bounds = array<i64: 32, 128>}, {pipeline_mode = #tpu.pipeline_mode<synchronous>, transform_indices = @transform_3, window_bounds = array<i64: 8, 32>}, {pipeline_mode = #tpu.pipeline_mode<synchronous>, transform_indices = @transform_4, window_bounds = array<i64: 8, 32>}, {pipeline_mode = #tpu.pipeline_mode<synchronous>, transform_indices = @transform_5, window_bounds = array<i64: 8, 1>}, {transform_indices = @transform_6, window_bounds = array<i64: 1, 1, 256>}, {transform_indices = @transform_7, window_bounds = array<i64: 1, 16, 16>}]} {
    %c0 = arith.constant 0 : index
    %c0_0 = arith.constant 0 : index
    %c0_1 = arith.constant 0 : index
    %0 = vector.load %arg1[%c0, %c0_0, %c0_1] : memref<1x16x32xf32, #tpu.memory_space<vmem>>, vector<1x16x32xf32>
    %1 = vector.shape_cast %0 : vector<1x16x32xf32> to vector<16x32xf32>
    %c0_2 = arith.constant 0 : index
    %c0_3 = arith.constant 0 : index
    %c0_4 = arith.constant 0 : index
    %2 = vector.load %arg2[%c0_2, %c0_3, %c0_4] : memref<1x16x16xf32, #tpu.memory_space<vmem>>, vector<1x16x16xf32>
    %c0_5 = arith.constant 0 : index
    %c0_6 = arith.constant 0 : index
    %3 = vector.load %arg5[%c0_5, %c0_6] : memref<8x32xf32, #tpu.memory_space<vmem>>, vector<8x32xf32>
    %4 = vector.extract_strided_slice %3 {offsets = [0, 0], sizes = [1, 32], strides = [1, 1]} : vector<8x32xf32> to vector<1x32xf32>
    %5 = vector.extract_strided_slice %3 {offsets = [1, 0], sizes = [1, 32], strides = [1, 1]} : vector<8x32xf32> to vector<1x32xf32>
    %6 = vector.extract_strided_slice %3 {offsets = [2, 0], sizes = [1, 32], strides = [1, 1]} : vector<8x32xf32> to vector<1x32xf32>
    %7 = vector.extract_strided_slice %3 {offsets = [3, 0], sizes = [1, 32], strides = [1, 1]} : vector<8x32xf32> to vector<1x32xf32>
    %c0_7 = arith.constant 0 : index
    %c0_8 = arith.constant 0 : index
    %8 = vector.load %arg3[%c0_7, %c0_8] : memref<32x128xf32, #tpu.memory_space<vmem>>, vector<32x64xf32>
    %cst = arith.constant dense<0.000000e+00> : vector<16x64xf32>
    %9 = tpu.matmul %1, %8, %cst {dimension_numbers = #tpu.dot_dimension_numbers<[1], [0], [0], [1], [0, 0, 1, 1], [], []>} : vector<16x32xf32>, vector<32x64xf32>, vector<16x64xf32> -> vector<16x64xf32>
    %10 = vector.extract_strided_slice %9 {offsets = [0, 0], sizes = [16, 32], strides = [1, 1]} : vector<16x64xf32> to vector<16x32xf32>
    %11 = vector.shape_cast %10 : vector<16x32xf32> to vector<1x16x32xf32>
    %12 = vector.extract_strided_slice %9 {offsets = [0, 32], sizes = [16, 32], strides = [1, 1]} : vector<16x64xf32> to vector<16x32xf32>
    %13 = vector.shape_cast %12 : vector<16x32xf32> to vector<1x16x32xf32>
    "tpu.trace_start"() <{level = 10 : i32, message = "bij,bjh->bih"}> : () -> ()
    %cst_9 = arith.constant dense<0.000000e+00> : vector<1x16x32xf32>
    %14 = tpu.matmul %2, %11, %cst_9 {dimension_numbers = #tpu.dot_dimension_numbers<[2], [1], [1], [2], [0, 0, 0, 1, 1, 2], [0], [0]>} : vector<1x16x16xf32>, vector<1x16x32xf32>, vector<1x16x32xf32> -> vector<1x16x32xf32>
    "tpu.trace_stop"() : () -> ()
    %15 = arith.addf %14, %11 : vector<1x16x32xf32>
    %cst_10 = arith.constant 0.000000e+00 : f32
    %16 = vector.broadcast %cst_10 : f32 to vector<1x16x32xf32>
    %17 = arith.maximumf %15, %16 : vector<1x16x32xf32>
    %18 = arith.addf %17, %13 : vector<1x16x32xf32>
    %19 = vector.shape_cast %18 : vector<1x16x32xf32> to vector<16x32xf32>
    %c0_11 = arith.constant 0 : index
    %c64 = arith.constant 64 : index
    %20 = vector.load %arg3[%c0_11, %c64] : memref<32x128xf32, #tpu.memory_space<vmem>>, vector<32x32xf32>
    %cst_12 = arith.constant dense<0.000000e+00> : vector<16x32xf32>
    %21 = tpu.matmul %19, %20, %cst_12 {dimension_numbers = #tpu.dot_dimension_numbers<[1], [0], [0], [1], [0, 0, 1, 1], [], []>} : vector<16x32xf32>, vector<32x32xf32>, vector<16x32xf32> -> vector<16x32xf32>
    %22 = vector.broadcast %4 : vector<1x32xf32> to vector<16x32xf32>
    %23 = arith.addf %21, %22 : vector<16x32xf32>
    %cst_13 = arith.constant dense<0.000000e+00> : vector<16xf32>
    %24 = vector.multi_reduction <add>, %23, %cst_13 [1] : vector<16x32xf32> to vector<16xf32>
    %25 = vector.shape_cast %24 : vector<16xf32> to vector<16x1xf32>
    %cst_14 = arith.constant 3.200000e+01 : f32
    %26 = vector.broadcast %cst_14 : f32 to vector<16x1xf32>
    %27 = arith.divf %25, %26 : vector<16x1xf32>
    %28 = vector.broadcast %27 : vector<16x1xf32> to vector<16x32xf32>
    %29 = arith.subf %23, %28 : vector<16x32xf32>
    %30 = arith.mulf %29, %29 : vector<16x32xf32>
    %cst_15 = arith.constant dense<0.000000e+00> : vector<16xf32>
    %31 = vector.multi_reduction <add>, %30, %cst_15 [1] : vector<16x32xf32> to vector<16xf32>
    %32 = vector.shape_cast %31 : vector<16xf32> to vector<16x1xf32>
    %cst_16 = arith.constant 3.200000e+01 : f32
    %33 = vector.broadcast %cst_16 : f32 to vector<16x1xf32>
    %34 = arith.divf %32, %33 : vector<16x1xf32>
    %35 = vector.broadcast %27 : vector<16x1xf32> to vector<16x32xf32>
    %36 = arith.subf %23, %35 : vector<16x32xf32>
    %cst_17 = arith.constant 9.99999974E-6 : f32
    %37 = vector.broadcast %cst_17 : f32 to vector<16x1xf32>
    %38 = arith.addf %34, %37 : vector<16x1xf32>
    %39 = math.rsqrt %38 : vector<16x1xf32>
    %40 = vector.broadcast %39 : vector<16x1xf32> to vector<16x32xf32>
    %41 = arith.mulf %36, %40 : vector<16x32xf32>
    %42 = vector.broadcast %5 : vector<1x32xf32> to vector<16x32xf32>
    %43 = arith.mulf %41, %42 : vector<16x32xf32>
    %44 = vector.broadcast %6 : vector<1x32xf32> to vector<16x32xf32>
    %45 = arith.addf %43, %44 : vector<16x32xf32>
    %cst_18 = arith.constant 0.000000e+00 : f32
    %46 = vector.broadcast %cst_18 : f32 to vector<16x32xf32>
    %47 = arith.maximumf %45, %46 : vector<16x32xf32>
    %c0_19 = arith.constant 0 : index
    %c96 = arith.constant 96 : index
    %48 = vector.load %arg3[%c0_19, %c96] : memref<32x128xf32, #tpu.memory_space<vmem>>, vector<32x32xf32>
    %cst_20 = arith.constant dense<0.000000e+00> : vector<16x32xf32>
    %49 = tpu.matmul %47, %48, %cst_20 {dimension_numbers = #tpu.dot_dimension_numbers<[1], [0], [0], [1], [0, 0, 1, 1], [], []>} : vector<16x32xf32>, vector<32x32xf32>, vector<16x32xf32> -> vector<16x32xf32>
    %50 = vector.broadcast %7 : vector<1x32xf32> to vector<16x32xf32>
    %51 = arith.addf %49, %50 : vector<16x32xf32>
    %cst_21 = arith.constant 0.000000e+00 : f32
    %52 = vector.broadcast %cst_21 : f32 to vector<16x32xf32>
    %53 = arith.maximumf %51, %52 : vector<16x32xf32>
    %54 = vector.shape_cast %53 : vector<16x32xf32> to vector<1x16x32xf32>
    "tpu.trace_start"() <{level = 10 : i32, message = "bij,bjh->bih"}> : () -> ()
    %cst_22 = arith.constant dense<0.000000e+00> : vector<1x16x32xf32>
    %55 = tpu.matmul %2, %54, %cst_22 {dimension_numbers = #tpu.dot_dimension_numbers<[2], [1], [1], [2], [0, 0, 0, 1, 1, 2], [0], [0]>} : vector<1x16x16xf32>, vector<1x16x32xf32>, vector<1x16x32xf32> -> vector<1x16x32xf32>
    "tpu.trace_stop"() : () -> ()
    %56 = arith.addf %55, %54 : vector<1x16x32xf32>
    %c0_23 = arith.constant 0 : index
    %c0_24 = arith.constant 0 : index
    %57 = vector.load %arg4[%c0_23, %c0_24] : memref<8x32xf32, #tpu.memory_space<vmem>>, vector<8x32xf32>
    %58 = vector.shape_cast %57 : vector<8x32xf32> to vector<1x8x32xf32>
    "tpu.trace_start"() <{level = 10 : i32, message = "bkh,bnh->bkn"}> : () -> ()
    %cst_25 = arith.constant dense<0.000000e+00> : vector<1x8x16xf32>
    %59 = tpu.matmul %58, %56, %cst_25 {dimension_numbers = #tpu.dot_dimension_numbers<[2], [2], [1], [1], [0, 0, 0, 1, 1, 1], [0], [0]>} : vector<1x8x32xf32>, vector<1x16x32xf32>, vector<1x8x16xf32> -> vector<1x8x16xf32>
    "tpu.trace_stop"() : () -> ()
    %c0_26 = arith.constant 0 : index
    %c0_27 = arith.constant 0 : index
    %60 = vector.load %arg6[%c0_26, %c0_27] : memref<8x1xf32, #tpu.memory_space<vmem>>, vector<8x1xf32>
    %61 = vector.shape_cast %60 : vector<8x1xf32> to vector<1x8x1xf32>
    %62 = vector.broadcast %61 : vector<1x8x1xf32> to vector<1x8x16xf32>
    %63 = arith.addf %59, %62 : vector<1x8x16xf32>
    %cst_28 = arith.constant 1.000000e+00 : f32
    %64 = vector.broadcast %cst_28 : f32 to vector<1x8x16xf32>
    %65 = arith.mulf %63, %64 : vector<1x8x16xf32>
    %cst_29 = arith.constant dense<0xFF800000> : vector<1x16xf32>
    %66 = vector.multi_reduction <maximumf>, %65, %cst_29 [1] : vector<1x8x16xf32> to vector<1x16xf32>
    %67 = vector.shape_cast %66 : vector<1x16xf32> to vector<1x1x16xf32>
    %68 = vector.broadcast %67 : vector<1x1x16xf32> to vector<1x8x16xf32>
    %69 = arith.subf %65, %68 : vector<1x8x16xf32>
    %70 = math.exp %69 : vector<1x8x16xf32>
    %cst_30 = arith.constant dense<0.000000e+00> : vector<1x16xf32>
    %71 = vector.multi_reduction <add>, %70, %cst_30 [1] : vector<1x8x16xf32> to vector<1x16xf32>
    %72 = vector.shape_cast %71 : vector<1x16xf32> to vector<1x1x16xf32>
    %73 = vector.broadcast %72 : vector<1x1x16xf32> to vector<1x8x16xf32>
    %74 = arith.divf %70, %73 : vector<1x8x16xf32>
    "tpu.trace_start"() <{level = 10 : i32, message = "bkn,bnh->bkh"}> : () -> ()
    %cst_31 = arith.constant dense<0.000000e+00> : vector<1x8x32xf32>
    %75 = tpu.matmul %74, %0, %cst_31 {dimension_numbers = #tpu.dot_dimension_numbers<[2], [1], [1], [2], [0, 0, 0, 1, 1, 2], [0], [0]>} : vector<1x8x16xf32>, vector<1x16x32xf32>, vector<1x8x32xf32> -> vector<1x8x32xf32>
    "tpu.trace_stop"() : () -> ()
    %76 = vector.shape_cast %75 : vector<1x8x32xf32> to vector<1x1x256xf32>
    %c0_32 = arith.constant 0 : index
    %c0_33 = arith.constant 0 : index
    %c0_34 = arith.constant 0 : index
    %77 = vector.load %arg7[%c0_32, %c0_33, %c0_34] : memref<1x1x256xf32, #tpu.memory_space<vmem>>, vector<1x1x256xf32>
    tpu.vector_store %arg7[%c0_32, %c0_33, %c0_34], %76 {strides = array<i32>} : memref<1x1x256xf32, #tpu.memory_space<vmem>>, vector<1x1x256xf32>,
    %c0_35 = arith.constant 0 : index
    %c0_36 = arith.constant 0 : index
    %c0_37 = arith.constant 0 : index
    %78 = vector.load %arg8[%c0_35, %c0_36, %c0_37] : memref<1x16x16xf32, #tpu.memory_space<vmem>>, vector<1x8x16xf32>
    tpu.vector_store %arg8[%c0_35, %c0_36, %c0_37], %74 {strides = array<i32>} : memref<1x16x16xf32, #tpu.memory_space<vmem>>, vector<1x8x16xf32>,
    %c0_38 = arith.constant 0 : index
    %c8 = arith.constant 8 : index
    %c0_39 = arith.constant 0 : index
    %79 = vector.load %arg8[%c0_38, %c8, %c0_39] : memref<1x16x16xf32, #tpu.memory_space<vmem>>, vector<1x8x16xf32>
    tpu.vector_store %arg8[%c0_38, %c8, %c0_39], %65 {strides = array<i32>} : memref<1x16x16xf32, #tpu.memory_space<vmem>>, vector<1x8x16xf32>,
    return
  }
  func.func @transform_0(%arg0: i32) -> (i32, i32, i32) {
    %c0_i32 = arith.constant 0 : i32
    %c0_i32_0 = arith.constant 0 : i32
    %c0_i32_1 = arith.constant 0 : i32
    return %arg0, %c0_i32, %c0_i32_0 : i32, i32, i32
  }
  func.func @transform_1(%arg0: i32) -> (i32, i32, i32) {
    %c0_i32 = arith.constant 0 : i32
    %c0_i32_0 = arith.constant 0 : i32
    %c0_i32_1 = arith.constant 0 : i32
    return %arg0, %c0_i32, %c0_i32_0 : i32, i32, i32
  }
  func.func @transform_2(%arg0: i32) -> (i32, i32) {
    %c0_i32 = arith.constant 0 : i32
    %c0_i32_0 = arith.constant 0 : i32
    %c0_i32_1 = arith.constant 0 : i32
    return %c0_i32, %c0_i32_0 : i32, i32
  }
  func.func @transform_3(%arg0: i32) -> (i32, i32) {
    %c0_i32 = arith.constant 0 : i32
    %c0_i32_0 = arith.constant 0 : i32
    %c0_i32_1 = arith.constant 0 : i32
    return %c0_i32, %c0_i32_0 : i32, i32
  }
  func.func @transform_4(%arg0: i32) -> (i32, i32) {
    %c0_i32 = arith.constant 0 : i32
    %c0_i32_0 = arith.constant 0 : i32
    %c0_i32_1 = arith.constant 0 : i32
    return %c0_i32, %c0_i32_0 : i32, i32
  }
  func.func @transform_5(%arg0: i32) -> (i32, i32) {
    %c0_i32 = arith.constant 0 : i32
    %c0_i32_0 = arith.constant 0 : i32
    %c0_i32_1 = arith.constant 0 : i32
    return %c0_i32, %c0_i32_0 : i32, i32
  }
  func.func @transform_6(%arg0: i32) -> (i32, i32, i32) {
    %c0_i32 = arith.constant 0 : i32
    %c0_i32_0 = arith.constant 0 : i32
    %c0_i32_1 = arith.constant 0 : i32
    return %arg0, %c0_i32, %c0_i32_0 : i32, i32, i32
  }
  func.func @transform_7(%arg0: i32) -> (i32, i32, i32) {
    %c0_i32 = arith.constant 0 : i32
    %c0_i32_0 = arith.constant 0 : i32
    %c0_i32_1 = arith.constant 0 : i32
    return %arg0, %c0_i32, %c0_i32_0 : i32, i32, i32
  }
}

</mosaic_0001>

<llo_original>
// kernel: tpu_custom_call.1
$region0: #{tpu_custom_call.1}
  #allocation0 [shape = 'u32[]', space=smem, size = 0x4, offset = 0x4, fixed_abs, tag = 'smem constant byte address 0x4 - core index']
  #allocation1 [shape = 'u32[144,128]{1,0:T(1,128)}', space=vmem, size = 0x12000, scoped, tag = 'internal scratch']
  %s0 = inlined_call_operand.hbm [shape: f32[2,16,32], index: 0, kind: input, shape index: {}]
  %s1 = inlined_call_operand.hbm [shape: f32[2,16,16], index: 1, kind: input, shape index: {}]
  %s2 = inlined_call_operand.hbm [shape: f32[32,128], index: 2, kind: input, shape index: {}]
  %s3 = inlined_call_operand.vmem [shape: f32[8,32], index: 3, kind: input, shape index: {}]
  %s4 = inlined_call_operand.vmem [shape: f32[8,32], index: 4, kind: input, shape index: {}]
  %s5 = inlined_call_operand.vmem [shape: f32[8,1], index: 5, kind: input, shape index: {}]
  %s6 = inlined_call_operand.hbm [shape: f32[2,1,256], index: 6, kind: output, shape index: {0}]
  %s7 = inlined_call_operand.hbm [shape: f32[2,16,16], index: 7, kind: output, shape index: {1}]
  %8 = xla_tuple %s6, %s7
  %s9 = sld [smem:[#allocation0]]
  $region77: #{tpu_custom_call.1} parent=0
    _
  %s11 = ssub.s32 1, %s9
  %s12 = scalar_select 0, %s11, %s9
  $region1: #{tpu_custom_call.1} parent=0
    #allocation2 [shape = 'u8[16384]{0}', space=vmem, size = 0x4000, scoped, tag = 'input window, operand 0']
    #allocation3 [shape = 's32[2]{0}', space=sflag, size = 0x8, scoped, tag = 'scoped memory for tpu_custom_call.1']
    #allocation4 [shape = 's32[2]{0}', space=sflag, size = 0x8, scoped, tag = 'scoped memory for tpu_custom_call.1']
    #allocation5 [shape = 'u8[16384]{0}', space=vmem, size = 0x4000, scoped, tag = 'input window, operand 1']
    #allocation6 [shape = 's32[2]{0}', space=sflag, size = 0x8, scoped, tag = 'scoped memory for tpu_custom_call.1']
    #allocation7 [shape = 'u8[16384]{0}', space=vmem, size = 0x4000, scoped, tag = 'input window, operand 2, single buffered']
    #allocation8 [shape = 'u8[2048]{0}', space=vmem, size = 0x800, scoped, tag = 'output window, operand 0']
    #allocation9 [shape = 'u8[16384]{0}', space=vmem, size = 0x4000, scoped, tag = 'output window, operand 1']
    #allocation10 [shape = 's32[2]{0}', space=sflag, size = 0x8, scoped, tag = 'scoped memory for tpu_custom_call.1']
    %13 = vsyncpa [#allocation3], 0
    %s14 = scalar_lea.sflag [#allocation3], 1
    %15 = vsyncpa %s14, 0
    %16 = vsyncpa [#allocation6], 0
    %s17 = scalar_lea.sflag [#allocation6], 1
    %18 = vsyncpa %s17, 0
    %19 = vsyncpa [#allocation4], 0
    %s20 = scalar_lea.sflag [#allocation4], 1
    %21 = vsyncpa %s20, 0
    %22 = vsyncpa [#allocation10], 0
    %s23 = scalar_lea.sflag [#allocation10], 1
    %24 = vsyncpa %s23, 0
    loop: start=0, step=1, limit=4
    $region2: #{tpu_custom_call.1} parent=1 // loop_pre_header
      _
    $region3: #{tpu_custom_call.1} parent=1 // loop_header
      %s26 = sphi 0, %s30
      %p27 = scmp.ge.s32.totalorder %s26, 4
      %s36 = sphi 0, %s38
      %s39 = sphi 0, %s36
      %s40 = sphi 0, %s39
      %s56 = sphi 0, %s40
      %s62 = sphi 0, %s64
      %s65 = sphi 0, %s62
      %s66 = sphi 0, %s65
      %s82 = sphi 0, %s66
      %s86 = sphi 0, %s86
      %s88 = sphi 0, %s86
      %s89 = sphi 0, %s88
      %s103 = sphi 0, %s89
      %s107 = sphi 0, %s107
      %s109 = sphi 0, %s107
      %s110 = sphi 0, %s109
      %s124 = sphi 0, %s110
      %s128 = sphi 0, %s128
      %s130 = sphi 0, %s128
      %s131 = sphi 0, %s130
      %s145 = sphi 0, %s131
      %s149 = sphi 0, %s149
      %s151 = sphi 0, %s149
      %s152 = sphi 0, %s151
      %s166 = sphi 0, %s152
      %s172 = sphi 0, %s174
      %s175 = sphi 0, %s172
      %s176 = sphi 0, %s175
      %s192 = sphi 0, %s176
      %s198 = sphi 0, %s200
      %s201 = sphi 0, %s198
      %s202 = sphi 0, %s201
      %s218 = sphi 0, %s202
    $region4: #{tpu_custom_call.1} parent=1 // loop_header_branch
      %29 = sbr.rel (%p27) target = $region8
    $region5: #{tpu_custom_call.1} parent=1 // loop_body
      %s31 = ssub.s32 %s26, 1
      %s32 = ssub.s32 %s26, 2
      %s33 = sadd.s32 %s26, 1
      %s34 = ssub.s32 %s26, %s33
      %p35 = scmp.eq.s32.totalorder %s34, 0
      %s37 = sadd.s32 %s36, 1
      %s38 = scalar_select %p35, %s36, %s37
      %p41 = pneg %p35
      %p42 = scmp.eq.s32.totalorder %s26, 1
      %p43 = por %p41, %p42
      %p44 = scmp.ne.s32.totalorder %s36, %s39
      %p45 = scmp.eq.s32.totalorder %s26, 0
      %p46 = por %p44, %p45
      %p47 = scmp.ne.s32.totalorder %s36, %s39
      %p48 = scmp.eq.s32.totalorder %s31, 1
      %p49 = por %p47, %p48
      %p50 = scmp.ne.s32.totalorder %s39, %s40
      %p51 = scmp.eq.s32.totalorder %s31, 0
      %p52 = por %p50, %p51
      %p53 = scmp.ne.s32.totalorder %s39, %s40
      %p54 = scmp.eq.s32.totalorder %s32, 1
      %p55 = por %p53, %p54
      %p57 = scmp.ne.s32.totalorder %s40, %s56
      %p58 = scmp.eq.s32.totalorder %s32, 0
      %p59 = por %p57, %p58
      %s60 = ssub.s32 %s26, %s33
      %p61 = scmp.eq.s32.totalorder %s60, 0
      %s63 = sadd.s32 %s62, 1
      %s64 = scalar_select %p61, %s62, %s63
      %p67 = pneg %p61
      %p68 = scmp.eq.s32.totalorder %s26, 1
      %p69 = por %p67, %p68
      %p70 = scmp.ne.s32.totalorder %s62, %s65
      %p71 = scmp.eq.s32.totalorder %s26, 0
      %p72 = por %p70, %p71
      %p73 = scmp.ne.s32.totalorder %s62, %s65
      %p74 = scmp.eq.s32.totalorder %s31, 1
      %p75 = por %p73, %p74
      %p76 = scmp.ne.s32.totalorder %s65, %s66
      %p77 = scmp.eq.s32.totalorder %s31, 0
      %p78 = por %p76, %p77
      %p79 = scmp.ne.s32.totalorder %s65, %s66
      %p80 = scmp.eq.s32.totalorder %s32, 1
      %p81 = por %p79, %p80
      %p83 = scmp.ne.s32.totalorder %s66, %s82
      %p84 = scmp.eq.s32.totalorder %s32, 0
      %p85 = por %p83, %p84
      %s87 = sadd.s32 %s86, 1
      %p90 = scmp.eq.s32.totalorder %s26, 1
      %p91 = scmp.ne.s32.totalorder %s86, %s88
      %p92 = scmp.eq.s32.totalorder %s26, 0
      %p93 = por %p91, %p92
      %p94 = scmp.ne.s32.totalorder %s86, %s88
      %p95 = scmp.eq.s32.totalorder %s31, 1
      %p96 = por %p94, %p95
      %p97 = scmp.ne.s32.totalorder %s88, %s89
      %p98 = scmp.eq.s32.totalorder %s31, 0
      %p99 = por %p97, %p98
      %p100 = scmp.ne.s32.totalorder %s88, %s89
      %p101 = scmp.eq.s32.totalorder %s32, 1
      %p102 = por %p100, %p101
      %p104 = scmp.ne.s32.totalorder %s89, %s103
      %p105 = scmp.eq.s32.totalorder %s32, 0
      %p106 = por %p104, %p105
      %s108 = sadd.s32 %s107, 1
      %p111 = scmp.eq.s32.totalorder %s26, 1
      %p112 = scmp.ne.s32.totalorder %s107, %s109
      %p113 = scmp.eq.s32.totalorder %s26, 0
      %p114 = por %p112, %p113
      %p115 = scmp.ne.s32.totalorder %s107, %s109
      %p116 = scmp.eq.s32.totalorder %s31, 1
      %p117 = por %p115, %p116
      %p118 = scmp.ne.s32.totalorder %s109, %s110
      %p119 = scmp.eq.s32.totalorder %s31, 0
      %p120 = por %p118, %p119
      %p121 = scmp.ne.s32.totalorder %s109, %s110
      %p122 = scmp.eq.s32.totalorder %s32, 1
      %p123 = por %p121, %p122
      %p125 = scmp.ne.s32.totalorder %s110, %s124
      %p126 = scmp.eq.s32.totalorder %s32, 0
      %p127 = por %p125, %p126
      %s129 = sadd.s32 %s128, 1
      %p132 = scmp.eq.s32.totalorder %s26, 1
      %p133 = scmp.ne.s32.totalorder %s128, %s130
      %p134 = scmp.eq.s32.totalorder %s26, 0
      %p135 = por %p133, %p134
      %p136 = scmp.ne.s32.totalorder %s128, %s130
      %p137 = scmp.eq.s32.totalorder %s31, 1
      %p138 = por %p136, %p137
      %p139 = scmp.ne.s32.totalorder %s130, %s131
      %p140 = scmp.eq.s32.totalorder %s31, 0
      %p141 = por %p139, %p140
      %p142 = scmp.ne.s32.totalorder %s130, %s131
      %p143 = scmp.eq.s32.totalorder %s32, 1
      %p144 = por %p142, %p143
      %p146 = scmp.ne.s32.totalorder %s131, %s145
      %p147 = scmp.eq.s32.totalorder %s32, 0
      %p148 = por %p146, %p147
      %s150 = sadd.s32 %s149, 1
      %p153 = scmp.eq.s32.totalorder %s26, 1
      %p154 = scmp.ne.s32.totalorder %s149, %s151
      %p155 = scmp.eq.s32.totalorder %s26, 0
      %p156 = por %p154, %p155
      %p157 = scmp.ne.s32.totalorder %s149, %s151
      %p158 = scmp.eq.s32.totalorder %s31, 1
      %p159 = por %p157, %p158
      %p160 = scmp.ne.s32.totalorder %s151, %s152
      %p161 = scmp.eq.s32.totalorder %s31, 0
      %p162 = por %p160, %p161
      %p163 = scmp.ne.s32.totalorder %s151, %s152
      %p164 = scmp.eq.s32.totalorder %s32, 1
      %p165 = por %p163, %p164
      %p167 = scmp.ne.s32.totalorder %s152, %s166
      %p168 = scmp.eq.s32.totalorder %s32, 0
      %p169 = por %p167, %p168
      %s170 = ssub.s32 %s26, %s33
      %p171 = scmp.eq.s32.totalorder %s170, 0
      %s173 = sadd.s32 %s172, 1
      %s174 = scalar_select %p171, %s172, %s173
      %p177 = pneg %p171
      %p178 = scmp.eq.s32.totalorder %s26, 1
      %p179 = por %p177, %p178
      %p180 = scmp.ne.s32.totalorder %s172, %s175
      %p181 = scmp.eq.s32.totalorder %s26, 0
      %p182 = por %p180, %p181
      %p183 = scmp.ne.s32.totalorder %s172, %s175
      %p184 = scmp.eq.s32.totalorder %s31, 1
      %p185 = por %p183, %p184
      %p186 = scmp.ne.s32.totalorder %s175, %s176
      %p187 = scmp.eq.s32.totalorder %s31, 0
      %p188 = por %p186, %p187
      %p189 = scmp.ne.s32.totalorder %s175, %s176
      %p190 = scmp.eq.s32.totalorder %s32, 1
      %p191 = por %p189, %p190
      %p193 = scmp.ne.s32.totalorder %s176, %s192
      %p194 = scmp.eq.s32.totalorder %s32, 0
      %p195 = por %p193, %p194
      %s196 = ssub.s32 %s26, %s33
      %p197 = scmp.eq.s32.totalorder %s196, 0
      %s199 = sadd.s32 %s198, 1
      %s200 = scalar_select %p197, %s198, %s199
      %p203 = pneg %p197
      %p204 = scmp.eq.s32.totalorder %s26, 1
      %p205 = por %p203, %p204
      %p206 = scmp.ne.s32.totalorder %s198, %s201
      %p207 = scmp.eq.s32.totalorder %s26, 0
      %p208 = por %p206, %p207
      %p209 = scmp.ne.s32.totalorder %s198, %s201
      %p210 = scmp.eq.s32.totalorder %s31, 1
      %p211 = por %p209, %p210
      %p212 = scmp.ne.s32.totalorder %s201, %s202
      %p213 = scmp.eq.s32.totalorder %s31, 0
      %p214 = por %p212, %p213
      %p215 = scmp.ne.s32.totalorder %s201, %s202
      %p216 = scmp.eq.s32.totalorder %s32, 1
      %p217 = por %p215, %p216
      %p219 = scmp.ne.s32.totalorder %s202, %s218
      %p220 = scmp.eq.s32.totalorder %s32, 0
      %p221 = por %p219, %p220
      %p222 = scmp.le.s32.totalorder 1, %s26
      %p223 = scmp.lt.s32.totalorder %s26, 3
      %p224 = pnand %p222, %p223
      %p225 = pneg %p224
      // Predicated region
      $region9: #{tpu_custom_call.1} parent=5 // pred_check
        _
      $region10: #{tpu_custom_call.1} parent=5 // pred_check_branch
        %227 = sbr.rel (%p224) target = $region12
      $region11: #{tpu_custom_call.1} parent=5 // pred_region
        %s228 = ssub.s32 %s26, 1
        // Predicated region
        $region13: #{tpu_custom_call.1} parent=11 // pred_check
          %p229 = pneg %p99
        $region14: #{tpu_custom_call.1} parent=11 // pred_check_branch
          %231 = sbr.rel (%p229) target = $region16
        $region15: #{tpu_custom_call.1} parent=11 // pred_region
          %s233 = ssub.s32 512, 512
          %234 = vsyncadd [#allocation6], %s233
          %s235 = sshll.u32 [#allocation7], 4
          %s236 = int_to_ptr.vmem [resolvable:$true] %s235
          %241 = dma.hbm_to_vmem [thread:$0]  %s2, 512, %s236, [#allocation6], 128, 128, 8
        $region16: #{tpu_custom_call.1} parent=11 // pred_fallthru
          _
        // Predicated region
        $region17: #{tpu_custom_call.1} parent=11 // pred_check
          %p242 = pneg %p120
        $region18: #{tpu_custom_call.1} parent=11 // pred_check_branch
          %244 = sbr.rel (%p242) target = $region20
        $region19: #{tpu_custom_call.1} parent=11 // pred_region
          _
        $region20: #{tpu_custom_call.1} parent=11 // pred_fallthru
          _
        // Predicated region
        $region21: #{tpu_custom_call.1} parent=11 // pred_check
          %p245 = pneg %p141
        $region22: #{tpu_custom_call.1} parent=11 // pred_check_branch
          %247 = sbr.rel (%p245) target = $region24
        $region23: #{tpu_custom_call.1} parent=11 // pred_region
          _
        $region24: #{tpu_custom_call.1} parent=11 // pred_fallthru
          _
        // Predicated region
        $region25: #{tpu_custom_call.1} parent=11 // pred_check
          %p248 = pneg %p162
        $region26: #{tpu_custom_call.1} parent=11 // pred_check_branch
          %250 = sbr.rel (%p248) target = $region28
        $region27: #{tpu_custom_call.1} parent=11 // pred_region
          _
        $region28: #{tpu_custom_call.1} parent=11 // pred_fallthru
          _
      $region12: #{tpu_custom_call.1} parent=5 // pred_fallthru
        _
      %p251 = scmp.lt.s32.totalorder %s26, 2
      // Predicated region
      $region29: #{tpu_custom_call.1} parent=5 // pred_check
        %p252 = pneg %p251
      $region30: #{tpu_custom_call.1} parent=5 // pred_check_branch
        %254 = sbr.rel (%p252) target = $region32
      $region31: #{tpu_custom_call.1} parent=5 // pred_region
        // Predicated region
        $region33: #{tpu_custom_call.1} parent=31 // pred_check
          %p255 = pneg %p46
        $region34: #{tpu_custom_call.1} parent=31 // pred_check_branch
          %257 = sbr.rel (%p255) target = $region36
        $region35: #{tpu_custom_call.1} parent=31 // pred_region
          %s258 = sand.u32 %s36, 1
          %s259 = scalar_lea.sflag [#allocation3], %s258
          %s260 = sand.u32 %s36, 1
          %s261 = smul.addr %s260, 16
          %s262 = scalar_lea.vmem [#allocation2], %s261
          %s264 = ssub.s32 256, 256
          %265 = vsyncadd %s259, %s264
          %s266 = smul.addr %s26, 2
          %s267 = smul.addr %s266, 128
          %s268 = scalar_lea.hbm %s0, %s267
          %s269 = sshll.u32 %s262, 4
          %s270 = int_to_ptr.vmem [resolvable:$true] %s269
          %275 = dma.hbm_to_vmem [thread:$0]  %s268, 256, %s270, %s259, 128, 128, 8
        $region36: #{tpu_custom_call.1} parent=31 // pred_fallthru
          _
        // Predicated region
        $region37: #{tpu_custom_call.1} parent=31 // pred_check
          %p276 = pneg %p72
        $region38: #{tpu_custom_call.1} parent=31 // pred_check_branch
          %278 = sbr.rel (%p276) target = $region40
        $region39: #{tpu_custom_call.1} parent=31 // pred_region
          %s279 = sand.u32 %s26, 1
          %s280 = scalar_lea.sflag [#allocation6], %s279
          %s281 = sand.u32 %s62, 1
          %s282 = smul.addr %s281, 16
          %s283 = scalar_lea.vmem [#allocation5], %s282
          %s285 = ssub.s32 256, 256
          %286 = vsyncadd %s280, %s285
          %s287 = smul.addr %s26, 2
          %s288 = smul.addr %s287, 128
          %s289 = scalar_lea.hbm %s1, %s288
          %s290 = sshll.u32 %s283, 4
          %s291 = int_to_ptr.vmem [resolvable:$true] %s290
          %296 = dma.hbm_to_vmem [thread:$0]  %s289, 256, %s291, %s280, 128, 128, 8
        $region40: #{tpu_custom_call.1} parent=31 // pred_fallthru
          _
      $region32: #{tpu_custom_call.1} parent=5 // pred_fallthru
        _
      %p297 = scmp.le.s32.totalorder 1, %s26
      %p298 = scmp.lt.s32.totalorder %s26, 3
      %p299 = pnand %p297, %p298
      %p300 = pneg %p299
      // Predicated region
      $region41: #{tpu_custom_call.1} parent=5 // pred_check
        _
      $region42: #{tpu_custom_call.1} parent=5 // pred_check_branch
        %302 = sbr.rel (%p299) target = $region44
      $region43: #{tpu_custom_call.1} parent=5 // pred_region
        %s303 = ssub.s32 %s26, 1
        %s304 = sand.u32 %s39, 1
        %s305 = scalar_lea.sflag [#allocation3], %s304
        %s306 = sand.u32 %s39, 1
        %s307 = smul.addr %s306, 16
        %s308 = scalar_lea.vmem [#allocation2], %s307
        // Predicated region
        $region45: #{tpu_custom_call.1} parent=43 // pred_check
          %p309 = pneg %p52
        $region46: #{tpu_custom_call.1} parent=43 // pred_check_branch
          %311 = sbr.rel (%p309) target = $region48
        $region47: #{tpu_custom_call.1} parent=43 // pred_region
          %312 = dma.done %s305, 256
        $region48: #{tpu_custom_call.1} parent=43 // pred_fallthru
          _
        %s313 = sand.u32 %s31, 1
        %s314 = scalar_lea.sflag [#allocation6], %s313
        %s315 = sand.u32 %s65, 1
        %s316 = smul.addr %s315, 16
        %s317 = scalar_lea.vmem [#allocation5], %s316
        // Predicated region
        $region49: #{tpu_custom_call.1} parent=43 // pred_check
          %p318 = pneg %p78
        $region50: #{tpu_custom_call.1} parent=43 // pred_check_branch
          %320 = sbr.rel (%p318) target = $region52
        $region51: #{tpu_custom_call.1} parent=43 // pred_region
          %321 = dma.done %s314, 256
        $region52: #{tpu_custom_call.1} parent=43 // pred_fallthru
          _
        // Predicated region
        $region53: #{tpu_custom_call.1} parent=43 // pred_check
          %p322 = pneg %p99
        $region54: #{tpu_custom_call.1} parent=43 // pred_check_branch
          %324 = sbr.rel (%p322) target = $region56
        $region55: #{tpu_custom_call.1} parent=43 // pred_region
          %325 = dma.done [#allocation6], 512
        $region56: #{tpu_custom_call.1} parent=43 // pred_fallthru
          _
        %s326 = sand.u32 %s39, 1
        %s327 = scalar_lea.sflag [#allocation3], %s326
        %s328 = sand.u32 %s39, 1
        %s329 = smul.addr %s328, 16
        %s330 = scalar_lea.vmem [#allocation2], %s329
        %p331 = pneg %p52
        %p332 = pneg %p49
        %s333 = sand.u32 %s31, 1
        %s334 = scalar_lea.sflag [#allocation6], %s333
        %s335 = sand.u32 %s65, 1
        %s336 = smul.addr %s335, 16
        %s337 = scalar_lea.vmem [#allocation5], %s336
        %p338 = pneg %p78
        %p339 = pneg %p75
        %p340 = pneg %p99
        %p341 = pneg %p96
        %p342 = pneg %p120
        %p343 = pneg %p117
        %p344 = pneg %p141
        %p345 = pneg %p138
        %p346 = pneg %p162
        %p347 = pneg %p159
        %p348 = pneg %p188
        %p349 = pneg %p185
        %s350 = sand.u32 %s175, 1
        %s351 = scalar_lea.sflag [#allocation4], %s350
        %s352 = sand.u32 %s175, 1
        %s353 = smul.addr %s352, 2
        %s354 = scalar_lea.vmem [#allocation8], %s353
        %p355 = pneg %p214
        %p356 = pneg %p211
        %s357 = sand.u32 %s201, 1
        %s358 = scalar_lea.sflag [#allocation10], %s357
        %s359 = sand.u32 %s201, 1
        %s360 = smul.addr %s359, 16
        %s361 = scalar_lea.vmem [#allocation9], %s360
        %v362 = vld [vmem:[%s308] sm:$0xff]
        %v363 = vld [vmem:[%s308 + $0x8] sm:$0xff]
        %v364 = vld [vmem:[%s317] sm:$0xff]
        %v365 = vld [vmem:[%s317 + $0x8] sm:$0xff]
        %v366 = vld [vmem:[%s4] sm:$0xff]
        %v367 = vld [vmem:[#allocation7] sm:$0xff]
        %v368 = vld [vmem:[#allocation7 + $0x8] sm:$0xff]
        %v369 = vld [vmem:[#allocation7 + $0x10] sm:$0xff]
        %v370 = vld [vmem:[#allocation7 + $0x18] sm:$0xff]
        %vm371 = vcmask 261120
        %v373 = vsel %vm371, %v362, 0
        %v376 = vsel %vm371, %v363, 0
        %378 = vmatprep.subr.mxu0 0.0
        %379 = vmatpush1.msra.mxu0 %v367
        %380 = vmatprep.subr.mxu0 0.0
        %381 = vmatpush1.msra.mxu0 %v368
        %382 = vmatprep.subr.mxu0 0.0
        %383 = vmatpush1.msra.mxu0 %v369
        %384 = vmatprep.subr.mxu0 0.0
        %385 = vmatpush1.msra.mxu0 %v370
        %386 = vmatprep.subr.mxu0 0.0
        %387 = vmatpush1.msra.mxu0 0.0
        %388 = vmatprep.subr.mxu0 0.0
        %389 = vmatpush1.msra.mxu0 0.0
        %390 = vmatprep.subr.mxu0 0.0
        %391 = vmatpush1.msra.mxu0 0.0
        %392 = vmatprep.subr.mxu0 0.0
        %393 = vmatpush1.msra.mxu0 0.0
        %394 = vmatprep.subr.mxu0 0.0
        %395 = vmatpush1.msra.mxu0 0.0
        %396 = vmatprep.subr.mxu0 0.0
        %397 = vmatpush1.msra.mxu0 0.0
        %398 = vmatprep.subr.mxu0 0.0
        %399 = vmatpush1.msra.mxu0 0.0
        %400 = vmatprep.subr.mxu0 0.0
        %401 = vmatpush1.msra.mxu0 0.0
        %402 = vmatprep.subr.mxu0 0.0
        %403 = vmatpush1.msra.mxu0 0.0
        %404 = vmatprep.subr.mxu0 0.0
        %405 = vmatpush1.msra.mxu0 0.0
        %406 = vmatprep.subr.mxu0 0.0
        %407 = vmatpush1.msra.mxu0 0.0
        %408 = vmatprep.subr.mxu0 0.0
        %409 = vmatpush1.msra.mxu0 0.0
        %410 = vmatprep.subr.mxu0 0.0
        %411 = vmatpush1.msra.mxu0 0.0
        %412 = vmatprep.subr.mxu0 0.0
        %413 = vmatpush1.msra.mxu0 0.0
        %414 = vmatprep.subr.mxu0 0.0
        %415 = vmatpush1.msra.mxu0 0.0
        %416 = vmatprep.subr.mxu0 0.0
        %417 = vmatpush1.msra.mxu0 0.0
        %418 = vmatprep.subr.mxu0 0.0
        %419 = vmatpush1.msra.mxu0 0.0
        %420 = vmatprep.subr.mxu0 0.0
        %421 = vmatpush1.msra.mxu0 0.0
        %422 = vmatprep.subr.mxu0 0.0
        %423 = vmatpush1.msra.mxu0 0.0
        %424 = vmatprep.subr.mxu0 0.0
        %425 = vmatpush1.msra.mxu0 0.0
        %426 = vmatprep.subr.mxu0 0.0
        %427 = vmatpush1.msra.mxu0 0.0
        %428 = vmatprep.subr.mxu0 0.0
        %429 = vmatpush1.msra.mxu0 0.0
        %430 = vmatprep.subr.mxu0 0.0
        %431 = vmatpush1.msra.mxu0 0.0
        %432 = vmatprep.subr.mxu0 0.0
        %433 = vmatpush1.msra.mxu0 0.0
        %434 = vmatprep.subr.mxu0 0.0
        %435 = vmatpush1.msra.mxu0 0.0
        %436 = vmatprep.subr.mxu0 0.0
        %437 = vmatpush1.msra.mxu0 0.0
        %438 = vmatprep.subr.mxu0 0.0
        %439 = vmatpush1.msra.mxu0 0.0
        %440 = vmatprep.subr.mxu0 0.0
        %441 = vmatpush1.msra.mxu0 0.0
        %442 = vmatprep.mubr.f32.mxu0 0.0
        %443 = vmatmul.mubr.f32.gmra.mrb[0].mxu0 %v373
        %v444 = vpop.f32.mrb[0].mxu0
        %v445 = vadd.f32 0.0, %v444
        %v446 = vpop.f32.mrb[0].mxu0
        %447 = vmatprep.mubr.f32.mxu0 0.0
        %448 = vmatmul.mubr.f32.gmra.mrb[0].mxu0 %v376
        %v449 = vpop.f32.mrb[0].mxu0
        %v450 = vadd.f32 0.0, %v449
        %v451 = vpop.f32.mrb[0].mxu0
        %452 = vdwg.mxu0
        %vm453 = vcmask 130048
        %v455 = vsel %vm453, %v364, 0
        %v458 = vsel %vm453, %v365, 0
        %460 = vmatprep.subr.mxu0 0.0
        %461 = vmatpush1.msra.mxu0 %v445
        %462 = vmatprep.subr.mxu0 0.0
        %463 = vmatpush1.msra.mxu0 %v450
        %464 = vmatprep.subr.mxu0 0.0
        %465 = vmatpush1.msra.mxu0 0.0
        %466 = vmatprep.subr.mxu0 0.0
        %467 = vmatpush1.msra.mxu0 0.0
        %468 = vmatprep.subr.mxu0 0.0
        %469 = vmatpush1.msra.mxu0 0.0
        %470 = vmatprep.subr.mxu0 0.0
        %471 = vmatpush1.msra.mxu0 0.0
        %472 = vmatprep.subr.mxu0 0.0
        %473 = vmatpush1.msra.mxu0 0.0
        %474 = vmatprep.subr.mxu0 0.0
        %475 = vmatpush1.msra.mxu0 0.0
        %476 = vmatprep.subr.mxu0 0.0
        %477 = vmatpush1.msra.mxu0 0.0
        %478 = vmatprep.subr.mxu0 0.0
        %479 = vmatpush1.msra.mxu0 0.0
        %480 = vmatprep.subr.mxu0 0.0
        %481 = vmatpush1.msra.mxu0 0.0
        %482 = vmatprep.subr.mxu0 0.0
        %483 = vmatpush1.msra.mxu0 0.0
        %484 = vmatprep.subr.mxu0 0.0
        %485 = vmatpush1.msra.mxu0 0.0
        %486 = vmatprep.subr.mxu0 0.0
        %487 = vmatpush1.msra.mxu0 0.0
        %488 = vmatprep.subr.mxu0 0.0
        %489 = vmatpush1.msra.mxu0 0.0
        %490 = vmatprep.subr.mxu0 0.0
        %491 = vmatpush1.msra.mxu0 0.0
        %492 = vmatprep.subr.mxu0 0.0
        %493 = vmatpush1.msra.mxu0 0.0
        %494 = vmatprep.subr.mxu0 0.0
        %495 = vmatpush1.msra.mxu0 0.0
        %496 = vmatprep.subr.mxu0 0.0
        %497 = vmatpush1.msra.mxu0 0.0
        %498 = vmatprep.subr.mxu0 0.0
        %499 = vmatpush1.msra.mxu0 0.0
        %500 = vmatprep.subr.mxu0 0.0
        %501 = vmatpush1.msra.mxu0 0.0
        %502 = vmatprep.subr.mxu0 0.0
        %503 = vmatpush1.msra.mxu0 0.0
        %504 = vmatprep.subr.mxu0 0.0
        %505 = vmatpush1.msra.mxu0 0.0
        %506 = vmatprep.subr.mxu0 0.0
        %507 = vmatpush1.msra.mxu0 0.0
        %508 = vmatprep.subr.mxu0 0.0
        %509 = vmatpush1.msra.mxu0 0.0
        %510 = vmatprep.subr.mxu0 0.0
        %511 = vmatpush1.msra.mxu0 0.0
        %512 = vmatprep.subr.mxu0 0.0
        %513 = vmatpush1.msra.mxu0 0.0
        %514 = vmatprep.subr.mxu0 0.0
        %515 = vmatpush1.msra.mxu0 0.0
        %516 = vmatprep.subr.mxu0 0.0
        %517 = vmatpush1.msra.mxu0 0.0
        %518 = vmatprep.subr.mxu0 0.0
        %519 = vmatpush1.msra.mxu0 0.0
        %520 = vmatprep.subr.mxu0 0.0
        %521 = vmatpush1.msra.mxu0 0.0
        %522 = vmatprep.subr.mxu0 0.0
        %523 = vmatpush1.msra.mxu0 0.0
        %524 = vmatprep.mubr.f32.mxu0 0.0
        %525 = vmatmul.mubr.f32.gmra.mrb[0].mxu0 %v455
        %v526 = vpop.f32.mrb[0].mxu0
        %v527 = vadd.f32 %v445, %v526
        %v528 = vpop.f32.mrb[0].mxu0
        %529 = vmatprep.mubr.f32.mxu0 0.0
        %530 = vmatmul.mubr.f32.gmra.mrb[0].mxu0 %v458
        %v531 = vpop.f32.mrb[0].mxu0
        %v532 = vadd.f32 %v450, %v531
        %v533 = vpop.f32.mrb[0].mxu0
        %534 = vdwg.mxu0
        %v535 = vmax.f32 %v527, 0.0
        %v536 = vmax.f32 %v532, 0.0
        %539 = vrot.lane.b32.xlu0 %v445, 96
        %v540 = vpop.permute.xlu0 %539
        %541 = vrot.lane.b32.xlu0 %v450, 96
        %v542 = vpop.permute.xlu0 %541
        %v545 = vadd.f32 %v535, %v540
        %v546 = vadd.f32 %v536, %v542
        %v547 = vld [vmem:[#allocation7] sm:$0xff]
        %v548 = vld [vmem:[#allocation7 + $0x8] sm:$0xff]
        %v549 = vld [vmem:[#allocation7 + $0x10] sm:$0xff]
        %v550 = vld [vmem:[#allocation7 + $0x18] sm:$0xff]
        %v551 = vlaneseq
        %v552 = vshrl.u32 %v551, 7
        %v553 = vsub.s32 0, %v552
        %v554 = vrot.slane %v366, %v553
        %559 = vrot.lane.b32.xlu0 %v547, 64
        %v560 = vpop.permute.xlu0 %559
        %561 = vrot.lane.b32.xlu0 %v548, 64
        %v562 = vpop.permute.xlu0 %561
        %563 = vrot.lane.b32.xlu0 %v549, 64
        %v564 = vpop.permute.xlu0 %563
        %565 = vrot.lane.b32.xlu0 %v550, 64
        %v566 = vpop.permute.xlu0 %565
        %v572 = vsel %vm371, %v545, 0
        %v575 = vsel %vm371, %v546, 0
        %577 = vmatprep.subr.mxu0 0.0
        %578 = vmatpush1.msra.mxu0 %v560
        %579 = vmatprep.subr.mxu0 0.0
        %580 = vmatpush1.msra.mxu0 %v562
        %581 = vmatprep.subr.mxu0 0.0
        %582 = vmatpush1.msra.mxu0 %v564
        %583 = vmatprep.subr.mxu0 0.0
        %584 = vmatpush1.msra.mxu0 %v566
        %585 = vmatprep.subr.mxu0 0.0
        %586 = vmatpush1.msra.mxu0 0.0
        %587 = vmatprep.subr.mxu0 0.0
        %588 = vmatpush1.msra.mxu0 0.0
        %589 = vmatprep.subr.mxu0 0.0
        %590 = vmatpush1.msra.mxu0 0.0
        %591 = vmatprep.subr.mxu0 0.0
        %592 = vmatpush1.msra.mxu0 0.0
        %593 = vmatprep.subr.mxu0 0.0
        %594 = vmatpush1.msra.mxu0 0.0
        %595 = vmatprep.subr.mxu0 0.0
        %596 = vmatpush1.msra.mxu0 0.0
        %597 = vmatprep.subr.mxu0 0.0
        %598 = vmatpush1.msra.mxu0 0.0
        %599 = vmatprep.subr.mxu0 0.0
        %600 = vmatpush1.msra.mxu0 0.0
        %601 = vmatprep.subr.mxu0 0.0
        %602 = vmatpush1.msra.mxu0 0.0
        %603 = vmatprep.subr.mxu0 0.0
        %604 = vmatpush1.msra.mxu0 0.0
        %605 = vmatprep.subr.mxu0 0.0
        %606 = vmatpush1.msra.mxu0 0.0
        %607 = vmatprep.subr.mxu0 0.0
        %608 = vmatpush1.msra.mxu0 0.0
        %609 = vmatprep.subr.mxu0 0.0
        %610 = vmatpush1.msra.mxu0 0.0
        %611 = vmatprep.subr.mxu0 0.0
        %612 = vmatpush1.msra.mxu0 0.0
        %613 = vmatprep.subr.mxu0 0.0
        %614 = vmatpush1.msra.mxu0 0.0
        %615 = vmatprep.subr.mxu0 0.0
        %616 = vmatpush1.msra.mxu0 0.0
        %617 = vmatprep.subr.mxu0 0.0
        %618 = vmatpush1.msra.mxu0 0.0
        %619 = vmatprep.subr.mxu0 0.0
        %620 = vmatpush1.msra.mxu0 0.0
        %621 = vmatprep.subr.mxu0 0.0
        %622 = vmatpush1.msra.mxu0 0.0
        %623 = vmatprep.subr.mxu0 0.0
        %624 = vmatpush1.msra.mxu0 0.0
        %625 = vmatprep.subr.mxu0 0.0
        %626 = vmatpush1.msra.mxu0 0.0
        %627 = vmatprep.subr.mxu0 0.0
        %628 = vmatpush1.msra.mxu0 0.0
        %629 = vmatprep.subr.mxu0 0.0
        %630 = vmatpush1.msra.mxu0 0.0
        %631 = vmatprep.subr.mxu0 0.0
        %632 = vmatpush1.msra.mxu0 0.0
        %633 = vmatprep.subr.mxu0 0.0
        %634 = vmatpush1.msra.mxu0 0.0
        %635 = vmatprep.subr.mxu0 0.0
        %636 = vmatpush1.msra.mxu0 0.0
        %637 = vmatprep.subr.mxu0 0.0
        %638 = vmatpush1.msra.mxu0 0.0
        %639 = vmatprep.subr.mxu0 0.0
        %640 = vmatpush1.msra.mxu0 0.0
        %641 = vmatprep.mubr.f32.mxu0 0.0
        %642 = vmatmul.mubr.f32.gmra.mrb[0].mxu0 %v572
        %v643 = vpop.f32.mrb[0].mxu0
        %v644 = vadd.f32 %v554, %v643
        %v645 = vpop.f32.mrb[0].mxu0
        %646 = vmatprep.mubr.f32.mxu0 0.0
        %647 = vmatmul.mubr.f32.gmra.mrb[0].mxu0 %v575
        %v648 = vpop.f32.mrb[0].mxu0
        %v649 = vadd.f32 %v554, %v648
        %v650 = vpop.f32.mrb[0].mxu0
        %651 = vdwg.mxu0
        %v652 = vsel %vm371, %v644, 0.0
        %653 = vadd.xlane.f32.xlu0 %v652
        %v654 = vpop.xlane.xlu0 %653
        %v655 = vsel %vm371, %v649, 0.0
        %656 = vadd.xlane.f32.xlu0 %v655
        %v657 = vpop.xlane.xlu0 %656
        %v658 = vrcp.pop 32.0
        %v659 = vmul.f32 %v654, %v658
        %v660 = vmul.f32 %v657, %v658
        %v661 = vsub.f32 %v644, %v659
        %v662 = vsub.f32 %v649, %v660
        %v663 = vmul.f32 %v661, %v661
        %v664 = vmul.f32 %v662, %v662
        %v665 = vsel %vm371, %v663, 0.0
        %666 = vadd.xlane.f32.xlu0 %v665
        %v667 = vpop.xlane.xlu0 %666
        %v668 = vsel %vm371, %v664, 0.0
        %669 = vadd.xlane.f32.xlu0 %v668
        %v670 = vpop.xlane.xlu0 %669
        %v671 = vmul.f32 %v667, %v658
        %v672 = vmul.f32 %v670, %v658
        %v673 = vadd.f32 %v671, 1e-05
        %v674 = vadd.f32 %v672, 1e-05
        %v675 = vrsqrt.pop %v673
        %v676 = vrsqrt.pop %v674
        %v677 = vmul.f32 %v661, %v675
        %v678 = vmul.f32 %v662, %v676
        %v679 = vlaneseq
        %v680 = vshrl.u32 %v679, 7
        %v681 = vsub.s32 1, %v680
        %v682 = vrot.slane %v366, %v681
        %v683 = vmul.f32 %v677, %v682
        %v684 = vmul.f32 %v678, %v682
        %v685 = vlaneseq
        %v686 = vshrl.u32 %v685, 7
        %v687 = vsub.s32 2, %v686
        %v688 = vrot.slane %v366, %v687
        %v689 = vadd.f32 %v683, %v688
        %v690 = vadd.f32 %v684, %v688
        %v691 = vmax.f32 %v689, 0.0
        %v692 = vmax.f32 %v690, 0.0
        %v693 = vlaneseq
        %v694 = vshrl.u32 %v693, 7
        %v695 = vsub.s32 3, %v694
        %v696 = vrot.slane %v366, %v695
        %697 = vrot.lane.b32.xlu0 %v547, 32
        %v698 = vpop.permute.xlu0 %697
        %699 = vrot.lane.b32.xlu0 %v548, 32
        %v700 = vpop.permute.xlu0 %699
        %701 = vrot.lane.b32.xlu0 %v549, 32
        %v702 = vpop.permute.xlu0 %701
        %703 = vrot.lane.b32.xlu0 %v550, 32
        %v704 = vpop.permute.xlu0 %703
        %v710 = vsel %vm371, %v691, 0
        %v713 = vsel %vm371, %v692, 0
        %715 = vmatprep.subr.mxu0 0.0
        %716 = vmatpush1.msra.mxu0 %v698
        %717 = vmatprep.subr.mxu0 0.0
        %718 = vmatpush1.msra.mxu0 %v700
        %719 = vmatprep.subr.mxu0 0.0
        %720 = vmatpush1.msra.mxu0 %v702
        %721 = vmatprep.subr.mxu0 0.0
        %722 = vmatpush1.msra.mxu0 %v704
        %723 = vmatprep.subr.mxu0 0.0
        %724 = vmatpush1.msra.mxu0 0.0
        %725 = vmatprep.subr.mxu0 0.0
        %726 = vmatpush1.msra.mxu0 0.0
        %727 = vmatprep.subr.mxu0 0.0
        %728 = vmatpush1.msra.mxu0 0.0
        %729 = vmatprep.subr.mxu0 0.0
        %730 = vmatpush1.msra.mxu0 0.0
        %731 = vmatprep.subr.mxu0 0.0
        %732 = vmatpush1.msra.mxu0 0.0
        %733 = vmatprep.subr.mxu0 0.0
        %734 = vmatpush1.msra.mxu0 0.0
        %735 = vmatprep.subr.mxu0 0.0
        %736 = vmatpush1.msra.mxu0 0.0
        %737 = vmatprep.subr.mxu0 0.0
        %738 = vmatpush1.msra.mxu0 0.0
        %739 = vmatprep.subr.mxu0 0.0
        %740 = vmatpush1.msra.mxu0 0.0
        %741 = vmatprep.subr.mxu0 0.0
        %742 = vmatpush1.msra.mxu0 0.0
        %743 = vmatprep.subr.mxu0 0.0
        %744 = vmatpush1.msra.mxu0 0.0
        %745 = vmatprep.subr.mxu0 0.0
        %746 = vmatpush1.msra.mxu0 0.0
        %747 = vmatprep.subr.mxu0 0.0
        %748 = vmatpush1.msra.mxu0 0.0
        %749 = vmatprep.subr.mxu0 0.0
        %750 = vmatpush1.msra.mxu0 0.0
        %751 = vmatprep.subr.mxu0 0.0
        %752 = vmatpush1.msra.mxu0 0.0
        %753 = vmatprep.subr.mxu0 0.0
        %754 = vmatpush1.msra.mxu0 0.0
        %755 = vmatprep.subr.mxu0 0.0
        %756 = vmatpush1.msra.mxu0 0.0
        %757 = vmatprep.subr.mxu0 0.0
        %758 = vmatpush1.msra.mxu0 0.0
        %759 = vmatprep.subr.mxu0 0.0
        %760 = vmatpush1.msra.mxu0 0.0
        %761 = vmatprep.subr.mxu0 0.0
        %762 = vmatpush1.msra.mxu0 0.0
        %763 = vmatprep.subr.mxu0 0.0
        %764 = vmatpush1.msra.mxu0 0.0
        %765 = vmatprep.subr.mxu0 0.0
        %766 = vmatpush1.msra.mxu0 0.0
        %767 = vmatprep.subr.mxu0 0.0
        %768 = vmatpush1.msra.mxu0 0.0
        %769 = vmatprep.subr.mxu0 0.0
        %770 = vmatpush1.msra.mxu0 0.0
        %771 = vmatprep.subr.mxu0 0.0
        %772 = vmatpush1.msra.mxu0 0.0
        %773 = vmatprep.subr.mxu0 0.0
        %774 = vmatpush1.msra.mxu0 0.0
        %775 = vmatprep.subr.mxu0 0.0
        %776 = vmatpush1.msra.mxu0 0.0
        %777 = vmatprep.subr.mxu0 0.0
        %778 = vmatpush1.msra.mxu0 0.0
        %779 = vmatprep.mubr.f32.mxu0 0.0
        %780 = vmatmul.mubr.f32.gmra.mrb[0].mxu0 %v710
        %v781 = vpop.f32.mrb[0].mxu0
        %v782 = vadd.f32 %v696, %v781
        %v783 = vpop.f32.mrb[0].mxu0
        %784 = vmatprep.mubr.f32.mxu0 0.0
        %785 = vmatmul.mubr.f32.gmra.mrb[0].mxu0 %v713
        %v786 = vpop.f32.mrb[0].mxu0
        %v787 = vadd.f32 %v696, %v786
        %v788 = vpop.f32.mrb[0].mxu0
        %789 = vdwg.mxu0
        %v790 = vmax.f32 %v782, 0.0
        %v791 = vmax.f32 %v787, 0.0
        %792 = vmatprep.subr.mxu0 0.0
        %793 = vmatpush1.msra.mxu0 %v790
        %794 = vmatprep.subr.mxu0 0.0
        %795 = vmatpush1.msra.mxu0 %v791
        %796 = vmatprep.subr.mxu0 0.0
        %797 = vmatpush1.msra.mxu0 0.0
        %798 = vmatprep.subr.mxu0 0.0
        %799 = vmatpush1.msra.mxu0 0.0
        %800 = vmatprep.subr.mxu0 0.0
        %801 = vmatpush1.msra.mxu0 0.0
        %802 = vmatprep.subr.mxu0 0.0
        %803 = vmatpush1.msra.mxu0 0.0
        %804 = vmatprep.subr.mxu0 0.0
        %805 = vmatpush1.msra.mxu0 0.0
        %806 = vmatprep.subr.mxu0 0.0
        %807 = vmatpush1.msra.mxu0 0.0
        %808 = vmatprep.subr.mxu0 0.0
        %809 = vmatpush1.msra.mxu0 0.0
        %810 = vmatprep.subr.mxu0 0.0
        %811 = vmatpush1.msra.mxu0 0.0
        %812 = vmatprep.subr.mxu0 0.0
        %813 = vmatpush1.msra.mxu0 0.0
        %814 = vmatprep.subr.mxu0 0.0
        %815 = vmatpush1.msra.mxu0 0.0
        %816 = vmatprep.subr.mxu0 0.0
        %817 = vmatpush1.msra.mxu0 0.0
        %818 = vmatprep.subr.mxu0 0.0
        %819 = vmatpush1.msra.mxu0 0.0
        %820 = vmatprep.subr.mxu0 0.0
        %821 = vmatpush1.msra.mxu0 0.0
        %822 = vmatprep.subr.mxu0 0.0
        %823 = vmatpush1.msra.mxu0 0.0
        %824 = vmatprep.subr.mxu0 0.0
        %825 = vmatpush1.msra.mxu0 0.0
        %826 = vmatprep.subr.mxu0 0.0
        %827 = vmatpush1.msra.mxu0 0.0
        %828 = vmatprep.subr.mxu0 0.0
        %829 = vmatpush1.msra.mxu0 0.0
        %830 = vmatprep.subr.mxu0 0.0
        %831 = vmatpush1.msra.mxu0 0.0
        %832 = vmatprep.subr.mxu0 0.0
        %833 = vmatpush1.msra.mxu0 0.0
        %834 = vmatprep.subr.mxu0 0.0
        %835 = vmatpush1.msra.mxu0 0.0
        %836 = vmatprep.subr.mxu0 0.0
        %837 = vmatpush1.msra.mxu0 0.0
        %838 = vmatprep.subr.mxu0 0.0
        %839 = vmatpush1.msra.mxu0 0.0
        %840 = vmatprep.subr.mxu0 0.0
        %841 = vmatpush1.msra.mxu0 0.0
        %842 = vmatprep.subr.mxu0 0.0
        %843 = vmatpush1.msra.mxu0 0.0
        %844 = vmatprep.subr.mxu0 0.0
        %845 = vmatpush1.msra.mxu0 0.0
        %846 = vmatprep.subr.mxu0 0.0
        %847 = vmatpush1.msra.mxu0 0.0
        %848 = vmatprep.subr.mxu0 0.0
        %849 = vmatpush1.msra.mxu0 0.0
        %850 = vmatprep.subr.mxu0 0.0
        %851 = vmatpush1.msra.mxu0 0.0
        %852 = vmatprep.subr.mxu0 0.0
        %853 = vmatpush1.msra.mxu0 0.0
        %854 = vmatprep.subr.mxu0 0.0
        %855 = vmatpush1.msra.mxu0 0.0
        %856 = vmatprep.mubr.f32.mxu0 0.0
        %857 = vmatmul.mubr.f32.gmra.mrb[0].mxu0 %v455
        %v858 = vpop.f32.mrb[0].mxu0
        %v859 = vadd.f32 %v790, %v858
        %v860 = vpop.f32.mrb[0].mxu0
        %861 = vmatprep.mubr.f32.mxu0 0.0
        %862 = vmatmul.mubr.f32.gmra.mrb[0].mxu0 %v458
        %v863 = vpop.f32.mrb[0].mxu0
        %v864 = vadd.f32 %v791, %v863
        %v865 = vpop.f32.mrb[0].mxu0
        %866 = vdwg.mxu0
        %v867 = vld [vmem:[%s3] sm:$0xff]
        %v868 = vld [vmem:[%s5] sm:$0xff]
        %870 = vset.pattern.permute.xlu0 0
        %871 = vperm.xlu0 %870, %v868
        %v872 = vpop.permute.xlu0 %871
        %v875 = vsel %vm371, %v867, 0
        %v878 = vsel %vm371, %v859, 0
        %v881 = vsel %vm371, %v864, 0
        %883 = vmatprep.subr.mxu0 0.0
        %884 = vmatpush1.xpose.msra.mxu0 %v878
        %885 = vmatprep.subr.mxu0 0.0
        %886 = vmatpush1.xpose.msra.mxu0 %v881
        %887 = vmatprep.subr.mxu0 0.0
        %888 = vmatpush1.xpose.msra.mxu0 0.0
        %889 = vmatprep.subr.mxu0 0.0
        %890 = vmatpush1.xpose.msra.mxu0 0.0
        %891 = vmatprep.subr.mxu0 0.0
        %892 = vmatpush1.xpose.msra.mxu0 0.0
        %893 = vmatprep.subr.mxu0 0.0
        %894 = vmatpush1.xpose.msra.mxu0 0.0
        %895 = vmatprep.subr.mxu0 0.0
        %896 = vmatpush1.xpose.msra.mxu0 0.0
        %897 = vmatprep.subr.mxu0 0.0
        %898 = vmatpush1.xpose.msra.mxu0 0.0
        %899 = vmatprep.subr.mxu0 0.0
        %900 = vmatpush1.xpose.msra.mxu0 0.0
        %901 = vmatprep.subr.mxu0 0.0
        %902 = vmatpush1.xpose.msra.mxu0 0.0
        %903 = vmatprep.subr.mxu0 0.0
        %904 = vmatpush1.xpose.msra.mxu0 0.0
        %905 = vmatprep.subr.mxu0 0.0
        %906 = vmatpush1.xpose.msra.mxu0 0.0
        %907 = vmatprep.subr.mxu0 0.0
        %908 = vmatpush1.xpose.msra.mxu0 0.0
        %909 = vmatprep.subr.mxu0 0.0
        %910 = vmatpush1.xpose.msra.mxu0 0.0
        %911 = vmatprep.subr.mxu0 0.0
        %912 = vmatpush1.xpose.msra.mxu0 0.0
        %913 = vmatprep.subr.mxu0 0.0
        %914 = vmatpush1.xpose.msra.mxu0 0.0
        %915 = vmatprep.subr.mxu0 0.0
        %916 = vmatpush1.xpose.msra.mxu0 0.0
        %917 = vmatprep.subr.mxu0 0.0
        %918 = vmatpush1.xpose.msra.mxu0 0.0
        %919 = vmatprep.subr.mxu0 0.0
        %920 = vmatpush1.xpose.msra.mxu0 0.0
        %921 = vmatprep.subr.mxu0 0.0
        %922 = vmatpush1.xpose.msra.mxu0 0.0
        %923 = vmatprep.subr.mxu0 0.0
        %924 = vmatpush1.xpose.msra.mxu0 0.0
        %925 = vmatprep.subr.mxu0 0.0
        %926 = vmatpush1.xpose.msra.mxu0 0.0
        %927 = vmatprep.subr.mxu0 0.0
        %928 = vmatpush1.xpose.msra.mxu0 0.0
        %929 = vmatprep.subr.mxu0 0.0
        %930 = vmatpush1.xpose.msra.mxu0 0.0
        %931 = vmatprep.subr.mxu0 0.0
        %932 = vmatpush1.xpose.msra.mxu0 0.0
        %933 = vmatprep.subr.mxu0 0.0
        %934 = vmatpush1.xpose.msra.mxu0 0.0
        %935 = vmatprep.subr.mxu0 0.0
        %936 = vmatpush1.xpose.msra.mxu0 0.0
        %937 = vmatprep.subr.mxu0 0.0
        %938 = vmatpush1.xpose.msra.mxu0 0.0
        %939 = vmatprep.subr.mxu0 0.0
        %940 = vmatpush1.xpose.msra.mxu0 0.0
        %941 = vmatprep.subr.mxu0 0.0
        %942 = vmatpush1.xpose.msra.mxu0 0.0
        %943 = vmatprep.subr.mxu0 0.0
        %944 = vmatpush1.xpose.msra.mxu0 0.0
        %945 = vmatprep.subr.mxu0 0.0
        %946 = vmatpush1.xpose.msra.mxu0 0.0
        %947 = vmatprep.mubr.f32.mxu0 0.0
        %948 = vmatmul.mubr.f32.gmra.mrb[0].mxu0 %v875
        %v949 = vpop.f32.mrb[0].mxu0
        %v950 = vadd.f32 %v872, %v949
        %v951 = vpop.f32.mrb[0].mxu0
        %952 = vdwg.mxu0
        %v953 = vsel %vm453, %v950, -inf
        %v954 = vrot.slane %v953, 4
        %v955 = vmax.f32 %v953, %v954
        %v956 = vrot.slane %v955, 2
        %v957 = vmax.f32 %v955, %v956
        %v958 = vrot.slane %v957, 1
        %v959 = vmax.f32 %v957, %v958
        %v960 = vsub.f32 %v950, %v959
        %v961 = vmul.f32 %v960, 1.442695
        %v962 = vpow.pop %v961
        %v963 = vsel %vm453, %v962, 0.0
        %v964 = vrot.slane %v963, 4
        %v965 = vadd.f32 %v963, %v964
        %v966 = vrot.slane %v965, 2
        %v967 = vadd.f32 %v965, %v966
        %v968 = vrot.slane %v967, 1
        %v969 = vadd.f32 %v967, %v968
        %v970 = vrcp.pop %v969
        %v971 = vmul.f32 %v962, %v970
        %v973 = vsel %vm453, %v971, 0
        %975 = vmatprep.subr.mxu0 0.0
        %976 = vmatpush1.msra.mxu0 %v362
        %977 = vmatprep.subr.mxu0 0.0
        %978 = vmatpush1.msra.mxu0 %v363
        %979 = vmatprep.subr.mxu0 0.0
        %980 = vmatpush1.msra.mxu0 0.0
        %981 = vmatprep.subr.mxu0 0.0
        %982 = vmatpush1.msra.mxu0 0.0
        %983 = vmatprep.subr.mxu0 0.0
        %984 = vmatpush1.msra.mxu0 0.0
        %985 = vmatprep.subr.mxu0 0.0
        %986 = vmatpush1.msra.mxu0 0.0
        %987 = vmatprep.subr.mxu0 0.0
        %988 = vmatpush1.msra.mxu0 0.0
        %989 = vmatprep.subr.mxu0 0.0
        %990 = vmatpush1.msra.mxu0 0.0
        %991 = vmatprep.subr.mxu0 0.0
        %992 = vmatpush1.msra.mxu0 0.0
        %993 = vmatprep.subr.mxu0 0.0
        %994 = vmatpush1.msra.mxu0 0.0
        %995 = vmatprep.subr.mxu0 0.0
        %996 = vmatpush1.msra.mxu0 0.0
        %997 = vmatprep.subr.mxu0 0.0
        %998 = vmatpush1.msra.mxu0 0.0
        %999 = vmatprep.subr.mxu0 0.0
        %1000 = vmatpush1.msra.mxu0 0.0
        %1001 = vmatprep.subr.mxu0 0.0
        %1002 = vmatpush1.msra.mxu0 0.0
        %1003 = vmatprep.subr.mxu0 0.0
        %1004 = vmatpush1.msra.mxu0 0.0
        %1005 = vmatprep.subr.mxu0 0.0
        %1006 = vmatpush1.msra.mxu0 0.0
        %1007 = vmatprep.subr.mxu0 0.0
        %1008 = vmatpush1.msra.mxu0 0.0
        %1009 = vmatprep.subr.mxu0 0.0
        %1010 = vmatpush1.msra.mxu0 0.0
        %1011 = vmatprep.subr.mxu0 0.0
        %1012 = vmatpush1.msra.mxu0 0.0
        %1013 = vmatprep.subr.mxu0 0.0
        %1014 = vmatpush1.msra.mxu0 0.0
        %1015 = vmatprep.subr.mxu0 0.0
        %1016 = vmatpush1.msra.mxu0 0.0
        %1017 = vmatprep.subr.mxu0 0.0
        %1018 = vmatpush1.msra.mxu0 0.0
        %1019 = vmatprep.subr.mxu0 0.0
        %1020 = vmatpush1.msra.mxu0 0.0
        %1021 = vmatprep.subr.mxu0 0.0
        %1022 = vmatpush1.msra.mxu0 0.0
        %1023 = vmatprep.subr.mxu0 0.0
        %1024 = vmatpush1.msra.mxu0 0.0
        %1025 = vmatprep.subr.mxu0 0.0
        %1026 = vmatpush1.msra.mxu0 0.0
        %1027 = vmatprep.subr.mxu0 0.0
        %1028 = vmatpush1.msra.mxu0 0.0
        %1029 = vmatprep.subr.mxu0 0.0
        %1030 = vmatpush1.msra.mxu0 0.0
        %1031 = vmatprep.subr.mxu0 0.0
        %1032 = vmatpush1.msra.mxu0 0.0
        %1033 = vmatprep.subr.mxu0 0.0
        %1034 = vmatpush1.msra.mxu0 0.0
        %1035 = vmatprep.subr.mxu0 0.0
        %1036 = vmatpush1.msra.mxu0 0.0
        %1037 = vmatprep.subr.mxu0 0.0
        %1038 = vmatpush1.msra.mxu0 0.0
        %1039 = vmatprep.mubr.f32.mxu0 0.0
        %1040 = vmatmul.mubr.f32.gmra.mrb[0].mxu0 %v973
        %v1041 = vpop.f32.mrb[0].mxu0
        %v1042 = vadd.f32 0.0, %v1041
        %v1043 = vpop.f32.mrb[0].mxu0
        %1044 = vdwg.mxu0
        %v1045 = vcombine.high %v1042, 0.0
        %v1047 = vunpack.c.l.s4 1983009808
        %v1048 = vunpack.c.0.s8 %v1047
        %v1049 = vlaneseq
        %v1050 = vshrl.u32 %v1049, 7
        %v1051 = vsub.s32 %v1048, %v1050
        %v1052 = vrot.slane %v1042, %v1051
        %v1054 = vunpack.c.l.s4 1983009808
        %v1055 = vunpack.c.0.s8 %v1054
        %v1056 = vlaneseq
        %v1057 = vshrl.u32 %v1056, 7
        %v1058 = vsub.s32 %v1055, %v1057
        %v1059 = vrot.slane %v1045, %v1058
        %v1060 = vcombine.high %v1052, 0.0
        %v1062 = vunpack.c.l.s4 1934713408
        %v1063 = vunpack.c.0.s8 %v1062
        %v1064 = vlaneseq
        %v1065 = vshrl.u32 %v1064, 7
        %v1066 = vsub.s32 %v1063, %v1065
        %v1067 = vrot.slane %v1052, %v1066
        %v1069 = vunpack.c.l.s4 1934713408
        %v1070 = vunpack.c.0.s8 %v1069
        %v1071 = vlaneseq
        %v1072 = vshrl.u32 %v1071, 7
        %v1073 = vsub.s32 %v1070, %v1072
        %v1074 = vrot.slane %v1060, %v1073
        %v1075 = vcombine.high %v1059, 0.0
        %v1077 = vunpack.c.l.s4 1934713408
        %v1078 = vunpack.c.0.s8 %v1077
        %v1079 = vlaneseq
        %v1080 = vshrl.u32 %v1079, 7
        %v1081 = vsub.s32 %v1078, %v1080
        %v1082 = vrot.slane %v1059, %v1081
        %v1084 = vunpack.c.l.s4 1934713408
        %v1085 = vunpack.c.0.s8 %v1084
        %v1086 = vlaneseq
        %v1087 = vshrl.u32 %v1086, 7
        %v1088 = vsub.s32 %v1085, %v1087
        %v1089 = vrot.slane %v1075, %v1088
        %v1090 = vcombine.high %v1067, 0.0
        %v1091 = vcombine.high %v1074, 0.0
        %v1092 = vcombine.high %v1082, 0.0
        %v1093 = vcombine.high %v1089, 0.0
        %1095 = vrot.lane.b32.xlu0 %v1090, 32
        %v1096 = vpop.permute.xlu0 %1095
        %1099 = vrot.lane.b32.xlu0 %v1074, 64
        %v1100 = vpop.permute.xlu0 %1099
        %1103 = vrot.lane.b32.xlu0 %v1091, 96
        %v1104 = vpop.permute.xlu0 %1103
        %1107 = vrot.lane.b32.xlu0 %v1092, 32
        %v1108 = vpop.permute.xlu0 %1107
        %1111 = vrot.lane.b32.xlu0 %v1089, 64
        %v1112 = vpop.permute.xlu0 %1111
        %1115 = vrot.lane.b32.xlu0 %v1093, 96
        %v1116 = vpop.permute.xlu0 %1115
        %v1118 = vsel %vm371, %v1067, %v1096
        %vm1119 = vcmask 523264
        %v1120 = vsel %vm1119, %v1118, %v1100
        %vm1121 = vcmask 785408
        %v1122 = vsel %vm1121, %v1120, %v1104
        %v1123 = vsel %vm371, %v1082, %v1108
        %v1124 = vsel %vm1119, %v1123, %v1112
        %v1125 = vsel %vm1121, %v1124, %v1116
        %v1128 = vcombine.low %v1122, %v1125
        %v1130 = vunpack.c.l.s4 1966171168
        %v1131 = vunpack.c.0.s8 %v1130
        %v1132 = vlaneseq
        %v1133 = vshrl.u32 %v1132, 7
        %v1134 = vsub.s32 %v1131, %v1133
        %v1135 = vrot.slane %v1128, %v1134
        %v1137 = vunpack.c.l.s4 1966171168
        %v1138 = vunpack.c.0.s8 %v1137
        %v1139 = vlaneseq
        %v1140 = vshrl.u32 %v1139, 7
        %v1141 = vsub.s32 %v1138, %v1140
        %v1142 = vrot.slane %v1135, %v1141
        %v1144 = vlaneseq
        %vm1145 = vcmp.ge.s32.totalorder %v1144, 0
        %vm1146 = vcmp.lt.s32.totalorder %v1144, 256
        %vm1147 = vmand %vm1145, %vm1146
        %1148 = vst.msk [vmem:[%s354] sm:$0x3] %vm1147, %v1142
        %1149 = vst.msk [vmem:[%s361] sm:$0xff] %vm453, %v971
        %1150 = vst.msk [vmem:[%s361 + $0x8] sm:$0xff] %vm453, %v950
        %s1151 = sand.u32 %s175, 1
        %s1152 = scalar_lea.sflag [#allocation4], %s1151
        %s1153 = sand.u32 %s175, 1
        %s1154 = smul.addr %s1153, 2
        %s1155 = scalar_lea.vmem [#allocation8], %s1154
        %s1156 = sand.u32 %s201, 1
        %s1157 = scalar_lea.sflag [#allocation10], %s1156
        %s1158 = sand.u32 %s201, 1
        %s1159 = smul.addr %s1158, 16
        %s1160 = scalar_lea.vmem [#allocation9], %s1159
        // Predicated region
        $region57: #{tpu_custom_call.1} parent=43 // pred_check
          %p1161 = pneg %p185
        $region58: #{tpu_custom_call.1} parent=43 // pred_check_branch
          %1163 = sbr.rel (%p1161) target = $region60
        $region59: #{tpu_custom_call.1} parent=43 // pred_region
          %s1165 = ssub.s32 32, 32
          %1166 = vsyncadd %s1152, %s1165
          %s1167 = smul.addr %s31, 2
          %s1168 = smul.addr %s1167, 16
          %s1169 = scalar_lea.hbm %s6, %s1168
          %s1171 = sshll.u32 %s1155, 4
          %s1172 = int_to_ptr.vmem [resolvable:$true] %s1171
          %1174 = dma.vmem_to_hbm [thread:$0]  %s1172, 32, %s1169, %s1152
        $region60: #{tpu_custom_call.1} parent=43 // pred_fallthru
          _
        // Predicated region
        $region61: #{tpu_custom_call.1} parent=43 // pred_check
          %p1175 = pneg %p211
        $region62: #{tpu_custom_call.1} parent=43 // pred_check_branch
          %1177 = sbr.rel (%p1175) target = $region64
        $region63: #{tpu_custom_call.1} parent=43 // pred_region
          %s1179 = ssub.s32 256, 256
          %1180 = vsyncadd %s1157, %s1179
          %s1181 = smul.addr %s31, 2
          %s1182 = smul.addr %s1181, 128
          %s1183 = scalar_lea.hbm %s7, %s1182
          %s1184 = sshll.u32 %s1160, 4
          %s1185 = int_to_ptr.vmem [resolvable:$true] %s1184
          %1190 = dma.vmem_to_hbm [thread:$0]  %s1185, 256, %s1183, %s1157, 128, 128, 8
        $region64: #{tpu_custom_call.1} parent=43 // pred_fallthru
          _
      $region44: #{tpu_custom_call.1} parent=5 // pred_fallthru
        _
      %p1191 = scmp.le.s32.totalorder 2, %s26
      // Predicated region
      $region65: #{tpu_custom_call.1} parent=5 // pred_check
        %p1192 = pneg %p1191
      $region66: #{tpu_custom_call.1} parent=5 // pred_check_branch
        %1194 = sbr.rel (%p1192) target = $region68
      $region67: #{tpu_custom_call.1} parent=5 // pred_region
        %s1195 = ssub.s32 %s26, 2
        // Predicated region
        $region69: #{tpu_custom_call.1} parent=67 // pred_check
          %p1196 = pneg %p191
        $region70: #{tpu_custom_call.1} parent=67 // pred_check_branch
          %1198 = sbr.rel (%p1196) target = $region72
        $region71: #{tpu_custom_call.1} parent=67 // pred_region
          %s1199 = sand.u32 %s176, 1
          %s1200 = scalar_lea.sflag [#allocation4], %s1199
          %s1201 = sand.u32 %s176, 1
          %s1202 = smul.addr %s1201, 2
          %s1203 = scalar_lea.vmem [#allocation8], %s1202
          %1204 = dma.done %s1200, 32
        $region72: #{tpu_custom_call.1} parent=67 // pred_fallthru
          _
        // Predicated region
        $region73: #{tpu_custom_call.1} parent=67 // pred_check
          %p1205 = pneg %p217
        $region74: #{tpu_custom_call.1} parent=67 // pred_check_branch
          %1207 = sbr.rel (%p1205) target = $region76
        $region75: #{tpu_custom_call.1} parent=67 // pred_region
          %s1208 = sand.u32 %s202, 1
          %s1209 = scalar_lea.sflag [#allocation10], %s1208
          %s1210 = sand.u32 %s202, 1
          %s1211 = smul.addr %s1210, 16
          %s1212 = scalar_lea.vmem [#allocation9], %s1211
          %1213 = dma.done %s1209, 256
        $region76: #{tpu_custom_call.1} parent=67 // pred_fallthru
          _
      $region68: #{tpu_custom_call.1} parent=5 // pred_fallthru
        _
    $region6: #{tpu_custom_call.1} parent=1 // loop_footer
      %s30 = sadd.s32 1, %s26
    $region7: #{tpu_custom_call.1} parent=1 // loop_footer_branch
      %25 = sbr.rel target = $region3
    $region8: #{tpu_custom_call.1} parent=1 // loop_exit
      _
    %1214 = vsyncpa [#allocation3], 1
    %s1215 = scalar_lea.sflag [#allocation3], 1
    %1216 = vsyncpa %s1215, 1
    %1217 = vsyncpa [#allocation6], 1
    %s1218 = scalar_lea.sflag [#allocation6], 1
    %1219 = vsyncpa %s1218, 1
    %1220 = vsyncpa [#allocation4], 1
    %s1221 = scalar_lea.sflag [#allocation4], 1
    %1222 = vsyncpa %s1221, 1
    %1223 = vsyncpa [#allocation10], 1
    %s1224 = scalar_lea.sflag [#allocation10], 1
    %1225 = vsyncpa %s1224, 1

</llo_original>
